<compile_context>
chip_gen: v5e
topology: v5e:2x2
jax: 0.10.0
libtpu: 0.0.40
codegen_flags: <defaults>
</compile_context>

<pallas_src>
import math
from functools import partial

import jax
import jax.numpy as jnp
from jax import lax
from jax.experimental import pallas as pl
from jax.experimental.pallas import tpu as pltpu  # noqa: F401 (CompilerParams used when scaling)


# ----------------------------- kernel helpers -----------------------------

def _layernorm(x, gamma, beta, eps=1e-5):
    # two-pass variance (matches PyTorch LayerNorm; avoids catastrophic
    # cancellation of the mean(x*x)-mu^2 form)
    mu = jnp.mean(x, axis=-1, keepdims=True)
    xc = x - mu
    var = jnp.mean(xc * xc, axis=-1, keepdims=True)
    return xc * lax.rsqrt(var + eps) * gamma + beta


# ------------------------------ Pallas kernel ------------------------------

def transformer_kernel(nhead, num_layers, batch, seq,
                       x_ref, pe_ref, emb_w_ref,
                       wqkv_ref, woh_ref, w1_ref, w2_ref,
                       vecd_ref, b1_ref, dec_w_ref, dec_b_ref,
                       out_ref):
    f32, bf16 = jnp.float32, jnp.bfloat16
    D = emb_w_ref.shape[1]
    dh = D // nhead
    scale = 1.0 / math.sqrt(dh)
    N = batch * seq                                     # flattened rows

    # ---- embedding + positional encoding -----------------------------------
    # nn.Linear(input_size, d_model) on flattened (B*S, F); emb bias is folded
    # into pe_ref.  PE row is indexed by BATCH element (reproduces original).
    h = jnp.dot(x_ref[...].astype(bf16), emb_w_ref[...],
                preferred_element_type=f32)             # (N, D) f32
    h = (h.reshape(batch, seq, D) + pe_ref[...][:, None, :]).reshape(N, D)

    def split_heads(t):
        # (N, D) -> (H*B, S, dh): lane slices + leading-axis stack + leading
        # reshapes only (all proven to lower).  Heads then live in the single
        # LEADING batch dim of the attention einsums.
        ts = jnp.stack([t[:, i * dh:(i + 1) * dh] for i in range(nhead)], axis=0)
        return ts.reshape(nhead * batch, seq, dh)

    # static unrolled layer loop: L=2 here; switch to fori_loop / layer grid
    # axis once L grows (bounded vreg live ranges, see header notes).
    for l in range(num_layers):
        # packed per-layer vectors: rows = bq,bk,bv,bo,b2,g1,be1,g2,be2
        vd = vecd_ref[l]                                # (9, D) f32
        bq, bk, bv, bo = vd[0:1], vd[1:2], vd[2:3], vd[3:4]
        b2, g1, be1, g2, be2 = vd[4:5], vd[5:6], vd[6:7], vd[7:8], vd[8:9]

        # ---- multi-head self-attention (post-norm, dropout = identity) ----
        hb = h.astype(bf16)
        q = jnp.dot(hb, wqkv_ref[l, 0], preferred_element_type=f32) + bq
        k = jnp.dot(hb, wqkv_ref[l, 1], preferred_element_type=f32) + bk
        v = jnp.dot(hb, wqkv_ref[l, 2], preferred_element_type=f32) + bv

        q_s = split_heads(q * scale).astype(bf16)       # (H*B, S, dh)
        k_s = split_heads(k).astype(bf16)
        v_s = split_heads(v).astype(bf16)

        # one batched contraction for scores, one for context (leading batch)
        s = jnp.einsum('nqd,nkd->nqk', q_s, k_s,
                       preferred_element_type=f32)      # (H*B, S, S) f32
        s = s - jnp.max(s, axis=-1, keepdims=True)
        p = jnp.exp(s)
        p = p * pl.reciprocal(jnp.sum(p, axis=-1, keepdims=True),
                              approx=True)              # softmax denom on EUP
        ctx = jnp.einsum('nqk,nkd->nqd', p.astype(bf16), v_s,
                         preferred_element_type=f32)    # (H*B, S, dh)

        # output projection: head-batched einsum against W_o (H, dh, D) and a
        # tiny static sum over heads — no lane concat (no XLU lane shuffle /
        # extra VMEM copy).
        ctx_h = ctx.reshape(nhead, N, dh).astype(bf16)  # leading-dim reshape
        attn_h = jnp.einsum('hnd,hde->hne', ctx_h, woh_ref[l],
                            preferred_element_type=f32)  # (H, N, D)
        attn = attn_h[0]
        for i in range(1, nhead):                       # static H=4, unrolled
            attn = attn + attn_h[i]
        attn = attn + bo

        h = _layernorm(h + attn, g1, be1)

        # ---- feed-forward (Linear -> ReLU -> Linear), post-norm ----
        ff = jnp.maximum(
            jnp.dot(h.astype(bf16), w1_ref[l], preferred_element_type=f32)
            + b1_ref[l], 0.0)
        ff = jnp.dot(ff.astype(bf16), w2_ref[l], preferred_element_type=f32) + b2
        h = _layernorm(h + ff, g2, be2)

    # ---- decoder: nn.Linear(d_model, input_size) ----
    # weight zero-padded to 128 output lanes -> unmasked lane-dense vst;
    # the wrapper slices [:, :F] back off.
    out_ref[...] = (jnp.dot(h.astype(bf16), dec_w_ref[...],
                            preferred_element_type=f32)
                    + dec_b_ref[...]).astype(out_ref.dtype)


# ------------------------------ JAX wrapper ------------------------------

def make_pe(max_len, d_model):
    pos = jnp.arange(max_len, dtype=jnp.float32)[:, None]
    div = jnp.exp(jnp.arange(0, d_model, 2, dtype=jnp.float32)
                  * (-math.log(10000.0) / d_model))
    pe = jnp.zeros((max_len, d_model), dtype=jnp.float32)
    pe = pe.at[:, 0::2].set(jnp.sin(pos * div))
    pe = pe.at[:, 1::2].set(jnp.cos(pos * div))
    return pe


def make_params(key, input_size, d_model, num_layers, dim_ff, max_len):
    ks = jax.random.split(key, 14)

    def init(k, shape, scale=0.05):
        return (scale * jax.random.normal(k, shape)).astype(jnp.float32)

    L, D, F, FF = num_layers, d_model, input_size, dim_ff
    return dict(
        pe=make_pe(max_len, D),
        emb_w=init(ks[0], (F, D)), emb_b=init(ks[1], (1, D)),
        wq=init(ks[2], (L, D, D)), bq=init(ks[3], (L, 1, D)),
        wk=init(ks[4], (L, D, D)), bk=init(ks[5], (L, 1, D)),
        wv=init(ks[6], (L, D, D)), bv=init(ks[7], (L, 1, D)),
        wo=init(ks[8], (L, D, D)), bo=init(ks[9], (L, 1, D)),
        w1=init(ks[10], (L, D, FF)), b1=init(ks[11], (L, 1, FF)),
        w2=init(ks[12], (L, FF, D)), b2=init(ks[13], (L, 1, D)),
        g1=jnp.ones((L, 1, D), jnp.float32), be1=jnp.zeros((L, 1, D), jnp.float32),
        g2=jnp.ones((L, 1, D), jnp.float32), be2=jnp.zeros((L, 1, D), jnp.float32),
        dec_w=init(jax.random.fold_in(key, 100), (D, F)),
        dec_b=init(jax.random.fold_in(key, 101), (1, F)),
    )


def prepare_params(params, nhead, batch):
    """One-time layout prep (hoisted out of the per-call hot path):
    weight stacking, head-major W_o, bf16 casts, packed per-layer vectors,
    emb-bias folded into PE, decoder padded to 128 lanes."""
    bf = jnp.bfloat16
    F, D = params["emb_w"].shape
    L = params["wq"].shape[0]
    dh = D // nhead
    Fpad = ((F + 127) // 128) * 128

    wqkv = jnp.stack([params["wq"], params["wk"], params["wv"]], axis=1).astype(bf)
    wo_h = params["wo"].reshape(L, nhead, dh, D).astype(bf)       # (L, H, dh, D)

    vec_d = jnp.stack([params["bq"][:, 0], params["bk"][:, 0], params["bv"][:, 0],
                       params["bo"][:, 0], params["b2"][:, 0],
                       params["g1"][:, 0], params["be1"][:, 0],
                       params["g2"][:, 0], params["be2"][:, 0]], axis=1)  # (L,9,D) f32

    pe_b = params["pe"][:batch] + params["emb_b"][0]              # (B, D) f32
    dec_w = jnp.zeros((D, Fpad), jnp.float32).at[:, :F].set(params["dec_w"]).astype(bf)
    dec_b = jnp.zeros((1, Fpad), jnp.float32).at[:, :F].set(params["dec_b"])

    return dict(emb_w=params["emb_w"].astype(bf), pe_b=pe_b,
                wqkv=wqkv, wo_h=wo_h,
                w1=params["w1"].astype(bf), w2=params["w2"].astype(bf),
                vec_d=vec_d, b1=params["b1"],
                dec_w=dec_w, dec_b=dec_b)


def transformer_forward(src, prep, nhead, num_layers):
    # src: (S, B, input_size), seq-first like PyTorch's default encoder input.
    S, B, F = src.shape
    Fpad = prep["dec_w"].shape[1]
    N = B * S

    x = jnp.transpose(src, (1, 0, 2)).reshape(N, F)               # (B*S, F)

    # single invocation, whole arrays resident in VMEM (no grid -> no pipeline,
    # no double-buffered weight copies).  See header for the layer-streamed /
    # 2-TensorCore plan at production sizes (set vmem_limit_bytes there).
    out = pl.pallas_call(
        partial(transformer_kernel, nhead, num_layers, B, S),
        out_shape=jax.ShapeDtypeStruct((N, Fpad), src.dtype),
    )(x, prep["pe_b"], prep["emb_w"],
      prep["wqkv"], prep["wo_h"], prep["w1"], prep["w2"],
      prep["vec_d"], prep["b1"], prep["dec_w"], prep["dec_b"])

    out = out[:, :F].reshape(B, S, F)
    return jnp.transpose(out, (1, 0, 2))                          # back to (S, B, F)


# ---------------------------------- main ----------------------------------

if __name__ == "__main__":
    # Small config consistent with TransformerConfig / TransformerModel
    S, B, F = 8, 2, 16          # sequence, batch, input_size
    D, H, L, FF = 32, 4, 2, 64  # d_model, nhead, num_layers, dim_feedforward

    key = jax.random.PRNGKey(0)
    kp, kx = jax.random.split(key)
    params = make_params(kp, F, D, L, FF, max_len=64)
    prep = prepare_params(params, nhead=H, batch=B)   # one-time layout prep
    src = jax.random.normal(kx, (S, B, F), dtype=jnp.float32)

    out = transformer_forward(src, prep, H, L)
    jax.block_until_ready(out)
    assert out.shape == (S, B, F) and out.dtype == jnp.float32
    print("KERNEL_OK")
</pallas_src>

<mosaic_0001>
module attributes {stable_mosaic.version = 11 : i64} {
  func.func @transformer_kernel(%arg0: memref<16x16xf32, #tpu.memory_space<vmem>>, %arg1: memref<2x32xf32, #tpu.memory_space<vmem>>, %arg2: memref<16x32xbf16, #tpu.memory_space<vmem>>, %arg3: memref<2x3x32x32xbf16, #tpu.memory_space<vmem>>, %arg4: memref<2x4x8x32xbf16, #tpu.memory_space<vmem>>, %arg5: memref<2x32x64xbf16, #tpu.memory_space<vmem>>, %arg6: memref<2x64x32xbf16, #tpu.memory_space<vmem>>, %arg7: memref<2x9x32xf32, #tpu.memory_space<vmem>>, %arg8: memref<2x1x64xf32, #tpu.memory_space<vmem>>, %arg9: memref<32x128xbf16, #tpu.memory_space<vmem>>, %arg10: memref<1x128xf32, #tpu.memory_space<vmem>>, %arg11: memref<16x128xf32, #tpu.memory_space<vmem>>) attributes {dimension_semantics = [], scalar_prefetch = 0 : i64, scratch_operands = 0 : i64, tpu.core_type = #tpu.core_type<tc>} {
    %c0 = arith.constant 0 : index
    %c0_0 = arith.constant 0 : index
    %0 = vector.load %arg0[%c0, %c0_0] : memref<16x16xf32, #tpu.memory_space<vmem>>, vector<16x16xf32>
    %1 = arith.truncf %0 : vector<16x16xf32> to vector<16x16xbf16>
    %c0_1 = arith.constant 0 : index
    %c0_2 = arith.constant 0 : index
    %2 = vector.load %arg2[%c0_1, %c0_2] : memref<16x32xbf16, #tpu.memory_space<vmem>>, vector<16x32xbf16>
    %cst = arith.constant dense<0.000000e+00> : vector<16x32xf32>
    %3 = tpu.matmul %1, %2, %cst {dimension_numbers = #tpu.dot_dimension_numbers<[1], [0], [0], [1], [0, 0, 1, 1], [], []>} : vector<16x16xbf16>, vector<16x32xbf16>, vector<16x32xf32> -> vector<16x32xf32>
    %4 = vector.shape_cast %3 : vector<16x32xf32> to vector<2x8x32xf32>
    %c0_3 = arith.constant 0 : index
    %c0_4 = arith.constant 0 : index
    %5 = vector.load %arg1[%c0_3, %c0_4] : memref<2x32xf32, #tpu.memory_space<vmem>>, vector<2x32xf32>
    %6 = vector.shape_cast %5 : vector<2x32xf32> to vector<2x1x32xf32>
    %7 = vector.broadcast %6 : vector<2x1x32xf32> to vector<2x8x32xf32>
    %8 = arith.addf %4, %7 : vector<2x8x32xf32>
    %9 = vector.shape_cast %8 : vector<2x8x32xf32> to vector<16x32xf32>
    %c0_5 = arith.constant 0 : index
    %c0_6 = arith.constant 0 : index
    %c0_7 = arith.constant 0 : index
    %10 = vector.load %arg7[%c0_5, %c0_6, %c0_7] : memref<2x9x32xf32, #tpu.memory_space<vmem>>, vector<1x9x32xf32>
    %11 = vector.shape_cast %10 : vector<1x9x32xf32> to vector<9x32xf32>
    %12 = vector.extract_strided_slice %11 {offsets = [0, 0], sizes = [1, 32], strides = [1, 1]} : vector<9x32xf32> to vector<1x32xf32>
    %13 = vector.extract_strided_slice %11 {offsets = [1, 0], sizes = [1, 32], strides = [1, 1]} : vector<9x32xf32> to vector<1x32xf32>
    %14 = vector.extract_strided_slice %11 {offsets = [2, 0], sizes = [1, 32], strides = [1, 1]} : vector<9x32xf32> to vector<1x32xf32>
    %15 = vector.extract_strided_slice %11 {offsets = [3, 0], sizes = [1, 32], strides = [1, 1]} : vector<9x32xf32> to vector<1x32xf32>
    %16 = vector.extract_strided_slice %11 {offsets = [4, 0], sizes = [1, 32], strides = [1, 1]} : vector<9x32xf32> to vector<1x32xf32>
    %17 = vector.extract_strided_slice %11 {offsets = [5, 0], sizes = [1, 32], strides = [1, 1]} : vector<9x32xf32> to vector<1x32xf32>
    %18 = vector.extract_strided_slice %11 {offsets = [6, 0], sizes = [1, 32], strides = [1, 1]} : vector<9x32xf32> to vector<1x32xf32>
    %19 = vector.extract_strided_slice %11 {offsets = [7, 0], sizes = [1, 32], strides = [1, 1]} : vector<9x32xf32> to vector<1x32xf32>
    %20 = vector.extract_strided_slice %11 {offsets = [8, 0], sizes = [1, 32], strides = [1, 1]} : vector<9x32xf32> to vector<1x32xf32>
    %21 = arith.truncf %9 : vector<16x32xf32> to vector<16x32xbf16>
    %c0_8 = arith.constant 0 : index
    %c0_9 = arith.constant 0 : index
    %c0_10 = arith.constant 0 : index
    %c0_11 = arith.constant 0 : index
    %22 = vector.load %arg3[%c0_8, %c0_9, %c0_10, %c0_11] : memref<2x3x32x32xbf16, #tpu.memory_space<vmem>>, vector<1x1x32x32xbf16>
    %23 = vector.shape_cast %22 : vector<1x1x32x32xbf16> to vector<32x32xbf16>
    %cst_12 = arith.constant dense<0.000000e+00> : vector<16x32xf32>
    %24 = tpu.matmul %21, %23, %cst_12 {dimension_numbers = #tpu.dot_dimension_numbers<[1], [0], [0], [1], [0, 0, 1, 1], [], []>} : vector<16x32xbf16>, vector<32x32xbf16>, vector<16x32xf32> -> vector<16x32xf32>
    %25 = vector.broadcast %12 : vector<1x32xf32> to vector<16x32xf32>
    %26 = arith.addf %24, %25 : vector<16x32xf32>
    %c0_13 = arith.constant 0 : index
    %c1 = arith.constant 1 : index
    %c0_14 = arith.constant 0 : index
    %c0_15 = arith.constant 0 : index
    %27 = vector.load %arg3[%c0_13, %c1, %c0_14, %c0_15] : memref<2x3x32x32xbf16, #tpu.memory_space<vmem>>, vector<1x1x32x32xbf16>
    %28 = vector.shape_cast %27 : vector<1x1x32x32xbf16> to vector<32x32xbf16>
    %cst_16 = arith.constant dense<0.000000e+00> : vector<16x32xf32>
    %29 = tpu.matmul %21, %28, %cst_16 {dimension_numbers = #tpu.dot_dimension_numbers<[1], [0], [0], [1], [0, 0, 1, 1], [], []>} : vector<16x32xbf16>, vector<32x32xbf16>, vector<16x32xf32> -> vector<16x32xf32>
    %30 = vector.broadcast %13 : vector<1x32xf32> to vector<16x32xf32>
    %31 = arith.addf %29, %30 : vector<16x32xf32>
    %c0_17 = arith.constant 0 : index
    %c2 = arith.constant 2 : index
    %c0_18 = arith.constant 0 : index
    %c0_19 = arith.constant 0 : index
    %32 = vector.load %arg3[%c0_17, %c2, %c0_18, %c0_19] : memref<2x3x32x32xbf16, #tpu.memory_space<vmem>>, vector<1x1x32x32xbf16>
    %33 = vector.shape_cast %32 : vector<1x1x32x32xbf16> to vector<32x32xbf16>
    %cst_20 = arith.constant dense<0.000000e+00> : vector<16x32xf32>
    %34 = tpu.matmul %21, %33, %cst_20 {dimension_numbers = #tpu.dot_dimension_numbers<[1], [0], [0], [1], [0, 0, 1, 1], [], []>} : vector<16x32xbf16>, vector<32x32xbf16>, vector<16x32xf32> -> vector<16x32xf32>
    %35 = vector.broadcast %14 : vector<1x32xf32> to vector<16x32xf32>
    %36 = arith.addf %34, %35 : vector<16x32xf32>
    %cst_21 = arith.constant 0.353553385 : f32
    %37 = vector.broadcast %cst_21 : f32 to vector<16x32xf32>
    %38 = arith.mulf %26, %37 : vector<16x32xf32>
    %39 = vector.extract_strided_slice %38 {offsets = [0, 0], sizes = [16, 8], strides = [1, 1]} : vector<16x32xf32> to vector<16x8xf32>
    %40 = vector.extract_strided_slice %38 {offsets = [0, 8], sizes = [16, 8], strides = [1, 1]} : vector<16x32xf32> to vector<16x8xf32>
    %41 = vector.extract_strided_slice %38 {offsets = [0, 16], sizes = [16, 8], strides = [1, 1]} : vector<16x32xf32> to vector<16x8xf32>
    %42 = vector.extract_strided_slice %38 {offsets = [0, 24], sizes = [16, 8], strides = [1, 1]} : vector<16x32xf32> to vector<16x8xf32>
    %43 = vector.shape_cast %39 : vector<16x8xf32> to vector<1x16x8xf32>
    %44 = vector.shape_cast %40 : vector<16x8xf32> to vector<1x16x8xf32>
    %45 = vector.shape_cast %41 : vector<16x8xf32> to vector<1x16x8xf32>
    %46 = vector.shape_cast %42 : vector<16x8xf32> to vector<1x16x8xf32>
    %47 = tpu.concatenate %43, %44, %45, %46 in 0 : vector<1x16x8xf32>, vector<1x16x8xf32>, vector<1x16x8xf32>, vector<1x16x8xf32> -> vector<4x16x8xf32>
    %48 = vector.shape_cast %47 : vector<4x16x8xf32> to vector<8x8x8xf32>
    %49 = arith.truncf %48 : vector<8x8x8xf32> to vector<8x8x8xbf16>
    %50 = vector.extract_strided_slice %31 {offsets = [0, 0], sizes = [16, 8], strides = [1, 1]} : vector<16x32xf32> to vector<16x8xf32>
    %51 = vector.extract_strided_slice %31 {offsets = [0, 8], sizes = [16, 8], strides = [1, 1]} : vector<16x32xf32> to vector<16x8xf32>
    %52 = vector.extract_strided_slice %31 {offsets = [0, 16], sizes = [16, 8], strides = [1, 1]} : vector<16x32xf32> to vector<16x8xf32>
    %53 = vector.extract_strided_slice %31 {offsets = [0, 24], sizes = [16, 8], strides = [1, 1]} : vector<16x32xf32> to vector<16x8xf32>
    %54 = vector.shape_cast %50 : vector<16x8xf32> to vector<1x16x8xf32>
    %55 = vector.shape_cast %51 : vector<16x8xf32> to vector<1x16x8xf32>
    %56 = vector.shape_cast %52 : vector<16x8xf32> to vector<1x16x8xf32>
    %57 = vector.shape_cast %53 : vector<16x8xf32> to vector<1x16x8xf32>
    %58 = tpu.concatenate %54, %55, %56, %57 in 0 : vector<1x16x8xf32>, vector<1x16x8xf32>, vector<1x16x8xf32>, vector<1x16x8xf32> -> vector<4x16x8xf32>
    %59 = vector.shape_cast %58 : vector<4x16x8xf32> to vector<8x8x8xf32>
    %60 = arith.truncf %59 : vector<8x8x8xf32> to vector<8x8x8xbf16>
    %61 = vector.extract_strided_slice %36 {offsets = [0, 0], sizes = [16, 8], strides = [1, 1]} : vector<16x32xf32> to vector<16x8xf32>
    %62 = vector.extract_strided_slice %36 {offsets = [0, 8], sizes = [16, 8], strides = [1, 1]} : vector<16x32xf32> to vector<16x8xf32>
    %63 = vector.extract_strided_slice %36 {offsets = [0, 16], sizes = [16, 8], strides = [1, 1]} : vector<16x32xf32> to vector<16x8xf32>
    %64 = vector.extract_strided_slice %36 {offsets = [0, 24], sizes = [16, 8], strides = [1, 1]} : vector<16x32xf32> to vector<16x8xf32>
    %65 = vector.shape_cast %61 : vector<16x8xf32> to vector<1x16x8xf32>
    %66 = vector.shape_cast %62 : vector<16x8xf32> to vector<1x16x8xf32>
    %67 = vector.shape_cast %63 : vector<16x8xf32> to vector<1x16x8xf32>
    %68 = vector.shape_cast %64 : vector<16x8xf32> to vector<1x16x8xf32>
    %69 = tpu.concatenate %65, %66, %67, %68 in 0 : vector<1x16x8xf32>, vector<1x16x8xf32>, vector<1x16x8xf32>, vector<1x16x8xf32> -> vector<4x16x8xf32>
    %70 = vector.shape_cast %69 : vector<4x16x8xf32> to vector<8x8x8xf32>
    %71 = arith.truncf %70 : vector<8x8x8xf32> to vector<8x8x8xbf16>
    "tpu.trace_start"() <{level = 10 : i32, message = "nqd,nkd->nqk"}> : () -> ()
    %cst_22 = arith.constant dense<0.000000e+00> : vector<8x8x8xf32>
    %72 = tpu.matmul %49, %60, %cst_22 {dimension_numbers = #tpu.dot_dimension_numbers<[2], [2], [1], [1], [0, 0, 0, 1, 1, 1], [0], [0]>} : vector<8x8x8xbf16>, vector<8x8x8xbf16>, vector<8x8x8xf32> -> vector<8x8x8xf32>
    "tpu.trace_stop"() : () -> ()
    %cst_23 = arith.constant dense<0xFF800000> : vector<8x8xf32>
    %73 = vector.multi_reduction <maximumf>, %72, %cst_23 [2] : vector<8x8x8xf32> to vector<8x8xf32>
    %74 = vector.shape_cast %73 : vector<8x8xf32> to vector<8x8x1xf32>
    %75 = vector.broadcast %74 : vector<8x8x1xf32> to vector<8x8x8xf32>
    %76 = arith.subf %72, %75 : vector<8x8x8xf32>
    %77 = math.exp %76 : vector<8x8x8xf32>
    %cst_24 = arith.constant dense<0.000000e+00> : vector<8x8xf32>
    %78 = vector.multi_reduction <add>, %77, %cst_24 [2] : vector<8x8x8xf32> to vector<8x8xf32>
    %79 = vector.shape_cast %78 : vector<8x8xf32> to vector<8x8x1xf32>
    %80 = tpu.reciprocal %79 {approx = true} : vector<8x8x1xf32> -> vector<8x8x1xf32>
    %81 = vector.broadcast %80 : vector<8x8x1xf32> to vector<8x8x8xf32>
    %82 = arith.mulf %77, %81 : vector<8x8x8xf32>
    %83 = arith.truncf %82 : vector<8x8x8xf32> to vector<8x8x8xbf16>
    "tpu.trace_start"() <{level = 10 : i32, message = "nqk,nkd->nqd"}> : () -> ()
    %cst_25 = arith.constant dense<0.000000e+00> : vector<8x8x8xf32>
    %84 = tpu.matmul %83, %71, %cst_25 {dimension_numbers = #tpu.dot_dimension_numbers<[2], [1], [1], [2], [0, 0, 0, 1, 1, 2], [0], [0]>} : vector<8x8x8xbf16>, vector<8x8x8xbf16>, vector<8x8x8xf32> -> vector<8x8x8xf32>
    "tpu.trace_stop"() : () -> ()
    %85 = vector.shape_cast %84 : vector<8x8x8xf32> to vector<4x16x8xf32>
    %86 = arith.truncf %85 : vector<4x16x8xf32> to vector<4x16x8xbf16>
    %c0_26 = arith.constant 0 : index
    %c0_27 = arith.constant 0 : index
    %c0_28 = arith.constant 0 : index
    %c0_29 = arith.constant 0 : index
    %87 = vector.load %arg4[%c0_26, %c0_27, %c0_28, %c0_29] : memref<2x4x8x32xbf16, #tpu.memory_space<vmem>>, vector<1x4x8x32xbf16>
    %88 = vector.shape_cast %87 : vector<1x4x8x32xbf16> to vector<4x8x32xbf16>
    "tpu.trace_start"() <{level = 10 : i32, message = "hnd,hde->hne"}> : () -> ()
    %cst_30 = arith.constant dense<0.000000e+00> : vector<4x16x32xf32>
    %89 = tpu.matmul %86, %88, %cst_30 {dimension_numbers = #tpu.dot_dimension_numbers<[2], [1], [1], [2], [0, 0, 0, 1, 1, 2], [0], [0]>} : vector<4x16x8xbf16>, vector<4x8x32xbf16>, vector<4x16x32xf32> -> vector<4x16x32xf32>
    "tpu.trace_stop"() : () -> ()
    %90 = vector.extract_strided_slice %89 {offsets = [0, 0, 0], sizes = [1, 16, 32], strides = [1, 1, 1]} : vector<4x16x32xf32> to vector<1x16x32xf32>
    %91 = vector.shape_cast %90 : vector<1x16x32xf32> to vector<16x32xf32>
    %92 = vector.extract_strided_slice %89 {offsets = [1, 0, 0], sizes = [1, 16, 32], strides = [1, 1, 1]} : vector<4x16x32xf32> to vector<1x16x32xf32>
    %93 = vector.shape_cast %92 : vector<1x16x32xf32> to vector<16x32xf32>
    %94 = arith.addf %91, %93 : vector<16x32xf32>
    %95 = vector.extract_strided_slice %89 {offsets = [2, 0, 0], sizes = [1, 16, 32], strides = [1, 1, 1]} : vector<4x16x32xf32> to vector<1x16x32xf32>
    %96 = vector.shape_cast %95 : vector<1x16x32xf32> to vector<16x32xf32>
    %97 = arith.addf %94, %96 : vector<16x32xf32>
    %98 = vector.extract_strided_slice %89 {offsets = [3, 0, 0], sizes = [1, 16, 32], strides = [1, 1, 1]} : vector<4x16x32xf32> to vector<1x16x32xf32>
    %99 = vector.shape_cast %98 : vector<1x16x32xf32> to vector<16x32xf32>
    %100 = arith.addf %97, %99 : vector<16x32xf32>
    %101 = vector.broadcast %15 : vector<1x32xf32> to vector<16x32xf32>
    %102 = arith.addf %100, %101 : vector<16x32xf32>
    %103 = arith.addf %9, %102 : vector<16x32xf32>
    %cst_31 = arith.constant dense<0.000000e+00> : vector<16xf32>
    %104 = vector.multi_reduction <add>, %103, %cst_31 [1] : vector<16x32xf32> to vector<16xf32>
    %105 = vector.shape_cast %104 : vector<16xf32> to vector<16x1xf32>
    %cst_32 = arith.constant 3.200000e+01 : f32
    %106 = vector.broadcast %cst_32 : f32 to vector<16x1xf32>
    %107 = arith.divf %105, %106 : vector<16x1xf32>
    %108 = vector.broadcast %107 : vector<16x1xf32> to vector<16x32xf32>
    %109 = arith.subf %103, %108 : vector<16x32xf32>
    %110 = arith.mulf %109, %109 : vector<16x32xf32>
    %cst_33 = arith.constant dense<0.000000e+00> : vector<16xf32>
    %111 = vector.multi_reduction <add>, %110, %cst_33 [1] : vector<16x32xf32> to vector<16xf32>
    %112 = vector.shape_cast %111 : vector<16xf32> to vector<16x1xf32>
    %cst_34 = arith.constant 3.200000e+01 : f32
    %113 = vector.broadcast %cst_34 : f32 to vector<16x1xf32>
    %114 = arith.divf %112, %113 : vector<16x1xf32>
    %cst_35 = arith.constant 9.99999974E-6 : f32
    %115 = vector.broadcast %cst_35 : f32 to vector<16x1xf32>
    %116 = arith.addf %114, %115 : vector<16x1xf32>
    %117 = math.rsqrt %116 : vector<16x1xf32>
    %118 = vector.broadcast %117 : vector<16x1xf32> to vector<16x32xf32>
    %119 = arith.mulf %109, %118 : vector<16x32xf32>
    %120 = vector.broadcast %17 : vector<1x32xf32> to vector<16x32xf32>
    %121 = arith.mulf %119, %120 : vector<16x32xf32>
    %122 = vector.broadcast %18 : vector<1x32xf32> to vector<16x32xf32>
    %123 = arith.addf %121, %122 : vector<16x32xf32>
    %124 = arith.truncf %123 : vector<16x32xf32> to vector<16x32xbf16>
    %c0_36 = arith.constant 0 : index
    %c0_37 = arith.constant 0 : index
    %c0_38 = arith.constant 0 : index
    %125 = vector.load %arg5[%c0_36, %c0_37, %c0_38] : memref<2x32x64xbf16, #tpu.memory_space<vmem>>, vector<1x32x64xbf16>
    %126 = vector.shape_cast %125 : vector<1x32x64xbf16> to vector<32x64xbf16>
    %cst_39 = arith.constant dense<0.000000e+00> : vector<16x64xf32>
    %127 = tpu.matmul %124, %126, %cst_39 {dimension_numbers = #tpu.dot_dimension_numbers<[1], [0], [0], [1], [0, 0, 1, 1], [], []>} : vector<16x32xbf16>, vector<32x64xbf16>, vector<16x64xf32> -> vector<16x64xf32>
    %c0_40 = arith.constant 0 : index
    %c0_41 = arith.constant 0 : index
    %c0_42 = arith.constant 0 : index
    %128 = vector.load %arg8[%c0_40, %c0_41, %c0_42] : memref<2x1x64xf32, #tpu.memory_space<vmem>>, vector<1x1x64xf32>
    %129 = vector.shape_cast %128 : vector<1x1x64xf32> to vector<1x64xf32>
    %130 = vector.broadcast %129 : vector<1x64xf32> to vector<16x64xf32>
    %131 = arith.addf %127, %130 : vector<16x64xf32>
    %cst_43 = arith.constant 0.000000e+00 : f32
    %132 = vector.broadcast %cst_43 : f32 to vector<16x64xf32>
    %133 = arith.maximumf %131, %132 : vector<16x64xf32>
    %134 = arith.truncf %133 : vector<16x64xf32> to vector<16x64xbf16>
    %c0_44 = arith.constant 0 : index
    %c0_45 = arith.constant 0 : index
    %c0_46 = arith.constant 0 : index
    %135 = vector.load %arg6[%c0_44, %c0_45, %c0_46] : memref<2x64x32xbf16, #tpu.memory_space<vmem>>, vector<1x64x32xbf16>
    %136 = vector.shape_cast %135 : vector<1x64x32xbf16> to vector<64x32xbf16>
    %cst_47 = arith.constant dense<0.000000e+00> : vector<16x32xf32>
    %137 = tpu.matmul %134, %136, %cst_47 {dimension_numbers = #tpu.dot_dimension_numbers<[1], [0], [0], [1], [0, 0, 1, 1], [], []>} : vector<16x64xbf16>, vector<64x32xbf16>, vector<16x32xf32> -> vector<16x32xf32>
    %138 = vector.broadcast %16 : vector<1x32xf32> to vector<16x32xf32>
    %139 = arith.addf %137, %138 : vector<16x32xf32>
    %140 = arith.addf %123, %139 : vector<16x32xf32>
    %cst_48 = arith.constant dense<0.000000e+00> : vector<16xf32>
    %141 = vector.multi_reduction <add>, %140, %cst_48 [1] : vector<16x32xf32> to vector<16xf32>
    %142 = vector.shape_cast %141 : vector<16xf32> to vector<16x1xf32>
    %cst_49 = arith.constant 3.200000e+01 : f32
    %143 = vector.broadcast %cst_49 : f32 to vector<16x1xf32>
    %144 = arith.divf %142, %143 : vector<16x1xf32>
    %145 = vector.broadcast %144 : vector<16x1xf32> to vector<16x32xf32>
    %146 = arith.subf %140, %145 : vector<16x32xf32>
    %147 = arith.mulf %146, %146 : vector<16x32xf32>
    %cst_50 = arith.constant dense<0.000000e+00> : vector<16xf32>
    %148 = vector.multi_reduction <add>, %147, %cst_50 [1] : vector<16x32xf32> to vector<16xf32>
    %149 = vector.shape_cast %148 : vector<16xf32> to vector<16x1xf32>
    %cst_51 = arith.constant 3.200000e+01 : f32
    %150 = vector.broadcast %cst_51 : f32 to vector<16x1xf32>
    %151 = arith.divf %149, %150 : vector<16x1xf32>
    %cst_52 = arith.constant 9.99999974E-6 : f32
    %152 = vector.broadcast %cst_52 : f32 to vector<16x1xf32>
    %153 = arith.addf %151, %152 : vector<16x1xf32>
    %154 = math.rsqrt %153 : vector<16x1xf32>
    %155 = vector.broadcast %154 : vector<16x1xf32> to vector<16x32xf32>
    %156 = arith.mulf %146, %155 : vector<16x32xf32>
    %157 = vector.broadcast %19 : vector<1x32xf32> to vector<16x32xf32>
    %158 = arith.mulf %156, %157 : vector<16x32xf32>
    %159 = vector.broadcast %20 : vector<1x32xf32> to vector<16x32xf32>
    %160 = arith.addf %158, %159 : vector<16x32xf32>
    %c1_53 = arith.constant 1 : index
    %c0_54 = arith.constant 0 : index
    %c0_55 = arith.constant 0 : index
    %161 = vector.load %arg7[%c1_53, %c0_54, %c0_55] : memref<2x9x32xf32, #tpu.memory_space<vmem>>, vector<1x9x32xf32>
    %162 = vector.shape_cast %161 : vector<1x9x32xf32> to vector<9x32xf32>
    %163 = vector.extract_strided_slice %162 {offsets = [0, 0], sizes = [1, 32], strides = [1, 1]} : vector<9x32xf32> to vector<1x32xf32>
    %164 = vector.extract_strided_slice %162 {offsets = [1, 0], sizes = [1, 32], strides = [1, 1]} : vector<9x32xf32> to vector<1x32xf32>
    %165 = vector.extract_strided_slice %162 {offsets = [2, 0], sizes = [1, 32], strides = [1, 1]} : vector<9x32xf32> to vector<1x32xf32>
    %166 = vector.extract_strided_slice %162 {offsets = [3, 0], sizes = [1, 32], strides = [1, 1]} : vector<9x32xf32> to vector<1x32xf32>
    %167 = vector.extract_strided_slice %162 {offsets = [4, 0], sizes = [1, 32], strides = [1, 1]} : vector<9x32xf32> to vector<1x32xf32>
    %168 = vector.extract_strided_slice %162 {offsets = [5, 0], sizes = [1, 32], strides = [1, 1]} : vector<9x32xf32> to vector<1x32xf32>
    %169 = vector.extract_strided_slice %162 {offsets = [6, 0], sizes = [1, 32], strides = [1, 1]} : vector<9x32xf32> to vector<1x32xf32>
    %170 = vector.extract_strided_slice %162 {offsets = [7, 0], sizes = [1, 32], strides = [1, 1]} : vector<9x32xf32> to vector<1x32xf32>
    %171 = vector.extract_strided_slice %162 {offsets = [8, 0], sizes = [1, 32], strides = [1, 1]} : vector<9x32xf32> to vector<1x32xf32>
    %172 = arith.truncf %160 : vector<16x32xf32> to vector<16x32xbf16>
    %c1_56 = arith.constant 1 : index
    %c0_57 = arith.constant 0 : index
    %c0_58 = arith.constant 0 : index
    %c0_59 = arith.constant 0 : index
    %173 = vector.load %arg3[%c1_56, %c0_57, %c0_58, %c0_59] : memref<2x3x32x32xbf16, #tpu.memory_space<vmem>>, vector<1x1x32x32xbf16>
    %174 = vector.shape_cast %173 : vector<1x1x32x32xbf16> to vector<32x32xbf16>
    %cst_60 = arith.constant dense<0.000000e+00> : vector<16x32xf32>
    %175 = tpu.matmul %172, %174, %cst_60 {dimension_numbers = #tpu.dot_dimension_numbers<[1], [0], [0], [1], [0, 0, 1, 1], [], []>} : vector<16x32xbf16>, vector<32x32xbf16>, vector<16x32xf32> -> vector<16x32xf32>
    %176 = vector.broadcast %163 : vector<1x32xf32> to vector<16x32xf32>
    %177 = arith.addf %175, %176 : vector<16x32xf32>
    %c1_61 = arith.constant 1 : index
    %c1_62 = arith.constant 1 : index
    %c0_63 = arith.constant 0 : index
    %c0_64 = arith.constant 0 : index
    %178 = vector.load %arg3[%c1_61, %c1_62, %c0_63, %c0_64] : memref<2x3x32x32xbf16, #tpu.memory_space<vmem>>, vector<1x1x32x32xbf16>
    %179 = vector.shape_cast %178 : vector<1x1x32x32xbf16> to vector<32x32xbf16>
    %cst_65 = arith.constant dense<0.000000e+00> : vector<16x32xf32>
    %180 = tpu.matmul %172, %179, %cst_65 {dimension_numbers = #tpu.dot_dimension_numbers<[1], [0], [0], [1], [0, 0, 1, 1], [], []>} : vector<16x32xbf16>, vector<32x32xbf16>, vector<16x32xf32> -> vector<16x32xf32>
    %181 = vector.broadcast %164 : vector<1x32xf32> to vector<16x32xf32>
    %182 = arith.addf %180, %181 : vector<16x32xf32>
    %c1_66 = arith.constant 1 : index
    %c2_67 = arith.constant 2 : index
    %c0_68 = arith.constant 0 : index
    %c0_69 = arith.constant 0 : index
    %183 = vector.load %arg3[%c1_66, %c2_67, %c0_68, %c0_69] : memref<2x3x32x32xbf16, #tpu.memory_space<vmem>>, vector<1x1x32x32xbf16>
    %184 = vector.shape_cast %183 : vector<1x1x32x32xbf16> to vector<32x32xbf16>
    %cst_70 = arith.constant dense<0.000000e+00> : vector<16x32xf32>
    %185 = tpu.matmul %172, %184, %cst_70 {dimension_numbers = #tpu.dot_dimension_numbers<[1], [0], [0], [1], [0, 0, 1, 1], [], []>} : vector<16x32xbf16>, vector<32x32xbf16>, vector<16x32xf32> -> vector<16x32xf32>
    %186 = vector.broadcast %165 : vector<1x32xf32> to vector<16x32xf32>
    %187 = arith.addf %185, %186 : vector<16x32xf32>
    %cst_71 = arith.constant 0.353553385 : f32
    %188 = vector.broadcast %cst_71 : f32 to vector<16x32xf32>
    %189 = arith.mulf %177, %188 : vector<16x32xf32>
    %190 = vector.extract_strided_slice %189 {offsets = [0, 0], sizes = [16, 8], strides = [1, 1]} : vector<16x32xf32> to vector<16x8xf32>
    %191 = vector.extract_strided_slice %189 {offsets = [0, 8], sizes = [16, 8], strides = [1, 1]} : vector<16x32xf32> to vector<16x8xf32>
    %192 = vector.extract_strided_slice %189 {offsets = [0, 16], sizes = [16, 8], strides = [1, 1]} : vector<16x32xf32> to vector<16x8xf32>
    %193 = vector.extract_strided_slice %189 {offsets = [0, 24], sizes = [16, 8], strides = [1, 1]} : vector<16x32xf32> to vector<16x8xf32>
    %194 = vector.shape_cast %190 : vector<16x8xf32> to vector<1x16x8xf32>
    %195 = vector.shape_cast %191 : vector<16x8xf32> to vector<1x16x8xf32>
    %196 = vector.shape_cast %192 : vector<16x8xf32> to vector<1x16x8xf32>
    %197 = vector.shape_cast %193 : vector<16x8xf32> to vector<1x16x8xf32>
    %198 = tpu.concatenate %194, %195, %196, %197 in 0 : vector<1x16x8xf32>, vector<1x16x8xf32>, vector<1x16x8xf32>, vector<1x16x8xf32> -> vector<4x16x8xf32>
    %199 = vector.shape_cast %198 : vector<4x16x8xf32> to vector<8x8x8xf32>
    %200 = arith.truncf %199 : vector<8x8x8xf32> to vector<8x8x8xbf16>
    %201 = vector.extract_strided_slice %182 {offsets = [0, 0], sizes = [16, 8], strides = [1, 1]} : vector<16x32xf32> to vector<16x8xf32>
    %202 = vector.extract_strided_slice %182 {offsets = [0, 8], sizes = [16, 8], strides = [1, 1]} : vector<16x32xf32> to vector<16x8xf32>
    %203 = vector.extract_strided_slice %182 {offsets = [0, 16], sizes = [16, 8], strides = [1, 1]} : vector<16x32xf32> to vector<16x8xf32>
    %204 = vector.extract_strided_slice %182 {offsets = [0, 24], sizes = [16, 8], strides = [1, 1]} : vector<16x32xf32> to vector<16x8xf32>
    %205 = vector.shape_cast %201 : vector<16x8xf32> to vector<1x16x8xf32>
    %206 = vector.shape_cast %202 : vector<16x8xf32> to vector<1x16x8xf32>
    %207 = vector.shape_cast %203 : vector<16x8xf32> to vector<1x16x8xf32>
    %208 = vector.shape_cast %204 : vector<16x8xf32> to vector<1x16x8xf32>
    %209 = tpu.concatenate %205, %206, %207, %208 in 0 : vector<1x16x8xf32>, vector<1x16x8xf32>, vector<1x16x8xf32>, vector<1x16x8xf32> -> vector<4x16x8xf32>
    %210 = vector.shape_cast %209 : vector<4x16x8xf32> to vector<8x8x8xf32>
    %211 = arith.truncf %210 : vector<8x8x8xf32> to vector<8x8x8xbf16>
    %212 = vector.extract_strided_slice %187 {offsets = [0, 0], sizes = [16, 8], strides = [1, 1]} : vector<16x32xf32> to vector<16x8xf32>
    %213 = vector.extract_strided_slice %187 {offsets = [0, 8], sizes = [16, 8], strides = [1, 1]} : vector<16x32xf32> to vector<16x8xf32>
    %214 = vector.extract_strided_slice %187 {offsets = [0, 16], sizes = [16, 8], strides = [1, 1]} : vector<16x32xf32> to vector<16x8xf32>
    %215 = vector.extract_strided_slice %187 {offsets = [0, 24], sizes = [16, 8], strides = [1, 1]} : vector<16x32xf32> to vector<16x8xf32>
    %216 = vector.shape_cast %212 : vector<16x8xf32> to vector<1x16x8xf32>
    %217 = vector.shape_cast %213 : vector<16x8xf32> to vector<1x16x8xf32>
    %218 = vector.shape_cast %214 : vector<16x8xf32> to vector<1x16x8xf32>
    %219 = vector.shape_cast %215 : vector<16x8xf32> to vector<1x16x8xf32>
    %220 = tpu.concatenate %216, %217, %218, %219 in 0 : vector<1x16x8xf32>, vector<1x16x8xf32>, vector<1x16x8xf32>, vector<1x16x8xf32> -> vector<4x16x8xf32>
    %221 = vector.shape_cast %220 : vector<4x16x8xf32> to vector<8x8x8xf32>
    %222 = arith.truncf %221 : vector<8x8x8xf32> to vector<8x8x8xbf16>
    "tpu.trace_start"() <{level = 10 : i32, message = "nqd,nkd->nqk"}> : () -> ()
    %cst_72 = arith.constant dense<0.000000e+00> : vector<8x8x8xf32>
    %223 = tpu.matmul %200, %211, %cst_72 {dimension_numbers = #tpu.dot_dimension_numbers<[2], [2], [1], [1], [0, 0, 0, 1, 1, 1], [0], [0]>} : vector<8x8x8xbf16>, vector<8x8x8xbf16>, vector<8x8x8xf32> -> vector<8x8x8xf32>
    "tpu.trace_stop"() : () -> ()
    %cst_73 = arith.constant dense<0xFF800000> : vector<8x8xf32>
    %224 = vector.multi_reduction <maximumf>, %223, %cst_73 [2] : vector<8x8x8xf32> to vector<8x8xf32>
    %225 = vector.shape_cast %224 : vector<8x8xf32> to vector<8x8x1xf32>
    %226 = vector.broadcast %225 : vector<8x8x1xf32> to vector<8x8x8xf32>
    %227 = arith.subf %223, %226 : vector<8x8x8xf32>
    %228 = math.exp %227 : vector<8x8x8xf32>
    %cst_74 = arith.constant dense<0.000000e+00> : vector<8x8xf32>
    %229 = vector.multi_reduction <add>, %228, %cst_74 [2] : vector<8x8x8xf32> to vector<8x8xf32>
    %230 = vector.shape_cast %229 : vector<8x8xf32> to vector<8x8x1xf32>
    %231 = tpu.reciprocal %230 {approx = true} : vector<8x8x1xf32> -> vector<8x8x1xf32>
    %232 = vector.broadcast %231 : vector<8x8x1xf32> to vector<8x8x8xf32>
    %233 = arith.mulf %228, %232 : vector<8x8x8xf32>
    %234 = arith.truncf %233 : vector<8x8x8xf32> to vector<8x8x8xbf16>
    "tpu.trace_start"() <{level = 10 : i32, message = "nqk,nkd->nqd"}> : () -> ()
    %cst_75 = arith.constant dense<0.000000e+00> : vector<8x8x8xf32>
    %235 = tpu.matmul %234, %222, %cst_75 {dimension_numbers = #tpu.dot_dimension_numbers<[2], [1], [1], [2], [0, 0, 0, 1, 1, 2], [0], [0]>} : vector<8x8x8xbf16>, vector<8x8x8xbf16>, vector<8x8x8xf32> -> vector<8x8x8xf32>
    "tpu.trace_stop"() : () -> ()
    %236 = vector.shape_cast %235 : vector<8x8x8xf32> to vector<4x16x8xf32>
    %237 = arith.truncf %236 : vector<4x16x8xf32> to vector<4x16x8xbf16>
    %c1_76 = arith.constant 1 : index
    %c0_77 = arith.constant 0 : index
    %c0_78 = arith.constant 0 : index
    %c0_79 = arith.constant 0 : index
    %238 = vector.load %arg4[%c1_76, %c0_77, %c0_78, %c0_79] : memref<2x4x8x32xbf16, #tpu.memory_space<vmem>>, vector<1x4x8x32xbf16>
    %239 = vector.shape_cast %238 : vector<1x4x8x32xbf16> to vector<4x8x32xbf16>
    "tpu.trace_start"() <{level = 10 : i32, message = "hnd,hde->hne"}> : () -> ()
    %cst_80 = arith.constant dense<0.000000e+00> : vector<4x16x32xf32>
    %240 = tpu.matmul %237, %239, %cst_80 {dimension_numbers = #tpu.dot_dimension_numbers<[2], [1], [1], [2], [0, 0, 0, 1, 1, 2], [0], [0]>} : vector<4x16x8xbf16>, vector<4x8x32xbf16>, vector<4x16x32xf32> -> vector<4x16x32xf32>
    "tpu.trace_stop"() : () -> ()
    %241 = vector.extract_strided_slice %240 {offsets = [0, 0, 0], sizes = [1, 16, 32], strides = [1, 1, 1]} : vector<4x16x32xf32> to vector<1x16x32xf32>
    %242 = vector.shape_cast %241 : vector<1x16x32xf32> to vector<16x32xf32>
    %243 = vector.extract_strided_slice %240 {offsets = [1, 0, 0], sizes = [1, 16, 32], strides = [1, 1, 1]} : vector<4x16x32xf32> to vector<1x16x32xf32>
    %244 = vector.shape_cast %243 : vector<1x16x32xf32> to vector<16x32xf32>
    %245 = arith.addf %242, %244 : vector<16x32xf32>
    %246 = vector.extract_strided_slice %240 {offsets = [2, 0, 0], sizes = [1, 16, 32], strides = [1, 1, 1]} : vector<4x16x32xf32> to vector<1x16x32xf32>
    %247 = vector.shape_cast %246 : vector<1x16x32xf32> to vector<16x32xf32>
    %248 = arith.addf %245, %247 : vector<16x32xf32>
    %249 = vector.extract_strided_slice %240 {offsets = [3, 0, 0], sizes = [1, 16, 32], strides = [1, 1, 1]} : vector<4x16x32xf32> to vector<1x16x32xf32>
    %250 = vector.shape_cast %249 : vector<1x16x32xf32> to vector<16x32xf32>
    %251 = arith.addf %248, %250 : vector<16x32xf32>
    %252 = vector.broadcast %166 : vector<1x32xf32> to vector<16x32xf32>
    %253 = arith.addf %251, %252 : vector<16x32xf32>
    %254 = arith.addf %160, %253 : vector<16x32xf32>
    %cst_81 = arith.constant dense<0.000000e+00> : vector<16xf32>
    %255 = vector.multi_reduction <add>, %254, %cst_81 [1] : vector<16x32xf32> to vector<16xf32>
    %256 = vector.shape_cast %255 : vector<16xf32> to vector<16x1xf32>
    %cst_82 = arith.constant 3.200000e+01 : f32
    %257 = vector.broadcast %cst_82 : f32 to vector<16x1xf32>
    %258 = arith.divf %256, %257 : vector<16x1xf32>
    %259 = vector.broadcast %258 : vector<16x1xf32> to vector<16x32xf32>
    %260 = arith.subf %254, %259 : vector<16x32xf32>
    %261 = arith.mulf %260, %260 : vector<16x32xf32>
    %cst_83 = arith.constant dense<0.000000e+00> : vector<16xf32>
    %262 = vector.multi_reduction <add>, %261, %cst_83 [1] : vector<16x32xf32> to vector<16xf32>
    %263 = vector.shape_cast %262 : vector<16xf32> to vector<16x1xf32>
    %cst_84 = arith.constant 3.200000e+01 : f32
    %264 = vector.broadcast %cst_84 : f32 to vector<16x1xf32>
    %265 = arith.divf %263, %264 : vector<16x1xf32>
    %cst_85 = arith.constant 9.99999974E-6 : f32
    %266 = vector.broadcast %cst_85 : f32 to vector<16x1xf32>
    %267 = arith.addf %265, %266 : vector<16x1xf32>
    %268 = math.rsqrt %267 : vector<16x1xf32>
    %269 = vector.broadcast %268 : vector<16x1xf32> to vector<16x32xf32>
    %270 = arith.mulf %260, %269 : vector<16x32xf32>
    %271 = vector.broadcast %168 : vector<1x32xf32> to vector<16x32xf32>
    %272 = arith.mulf %270, %271 : vector<16x32xf32>
    %273 = vector.broadcast %169 : vector<1x32xf32> to vector<16x32xf32>
    %274 = arith.addf %272, %273 : vector<16x32xf32>
    %275 = arith.truncf %274 : vector<16x32xf32> to vector<16x32xbf16>
    %c1_86 = arith.constant 1 : index
    %c0_87 = arith.constant 0 : index
    %c0_88 = arith.constant 0 : index
    %276 = vector.load %arg5[%c1_86, %c0_87, %c0_88] : memref<2x32x64xbf16, #tpu.memory_space<vmem>>, vector<1x32x64xbf16>
    %277 = vector.shape_cast %276 : vector<1x32x64xbf16> to vector<32x64xbf16>
    %cst_89 = arith.constant dense<0.000000e+00> : vector<16x64xf32>
    %278 = tpu.matmul %275, %277, %cst_89 {dimension_numbers = #tpu.dot_dimension_numbers<[1], [0], [0], [1], [0, 0, 1, 1], [], []>} : vector<16x32xbf16>, vector<32x64xbf16>, vector<16x64xf32> -> vector<16x64xf32>
    %c1_90 = arith.constant 1 : index
    %c0_91 = arith.constant 0 : index
    %c0_92 = arith.constant 0 : index
    %279 = vector.load %arg8[%c1_90, %c0_91, %c0_92] : memref<2x1x64xf32, #tpu.memory_space<vmem>>, vector<1x1x64xf32>
    %280 = vector.shape_cast %279 : vector<1x1x64xf32> to vector<1x64xf32>
    %281 = vector.broadcast %280 : vector<1x64xf32> to vector<16x64xf32>
    %282 = arith.addf %278, %281 : vector<16x64xf32>
    %cst_93 = arith.constant 0.000000e+00 : f32
    %283 = vector.broadcast %cst_93 : f32 to vector<16x64xf32>
    %284 = arith.maximumf %282, %283 : vector<16x64xf32>
    %285 = arith.truncf %284 : vector<16x64xf32> to vector<16x64xbf16>
    %c1_94 = arith.constant 1 : index
    %c0_95 = arith.constant 0 : index
    %c0_96 = arith.constant 0 : index
    %286 = vector.load %arg6[%c1_94, %c0_95, %c0_96] : memref<2x64x32xbf16, #tpu.memory_space<vmem>>, vector<1x64x32xbf16>
    %287 = vector.shape_cast %286 : vector<1x64x32xbf16> to vector<64x32xbf16>
    %cst_97 = arith.constant dense<0.000000e+00> : vector<16x32xf32>
    %288 = tpu.matmul %285, %287, %cst_97 {dimension_numbers = #tpu.dot_dimension_numbers<[1], [0], [0], [1], [0, 0, 1, 1], [], []>} : vector<16x64xbf16>, vector<64x32xbf16>, vector<16x32xf32> -> vector<16x32xf32>
    %289 = vector.broadcast %167 : vector<1x32xf32> to vector<16x32xf32>
    %290 = arith.addf %288, %289 : vector<16x32xf32>
    %291 = arith.addf %274, %290 : vector<16x32xf32>
    %cst_98 = arith.constant dense<0.000000e+00> : vector<16xf32>
    %292 = vector.multi_reduction <add>, %291, %cst_98 [1] : vector<16x32xf32> to vector<16xf32>
    %293 = vector.shape_cast %292 : vector<16xf32> to vector<16x1xf32>
    %cst_99 = arith.constant 3.200000e+01 : f32
    %294 = vector.broadcast %cst_99 : f32 to vector<16x1xf32>
    %295 = arith.divf %293, %294 : vector<16x1xf32>
    %296 = vector.broadcast %295 : vector<16x1xf32> to vector<16x32xf32>
    %297 = arith.subf %291, %296 : vector<16x32xf32>
    %298 = arith.mulf %297, %297 : vector<16x32xf32>
    %cst_100 = arith.constant dense<0.000000e+00> : vector<16xf32>
    %299 = vector.multi_reduction <add>, %298, %cst_100 [1] : vector<16x32xf32> to vector<16xf32>
    %300 = vector.shape_cast %299 : vector<16xf32> to vector<16x1xf32>
    %cst_101 = arith.constant 3.200000e+01 : f32
    %301 = vector.broadcast %cst_101 : f32 to vector<16x1xf32>
    %302 = arith.divf %300, %301 : vector<16x1xf32>
    %cst_102 = arith.constant 9.99999974E-6 : f32
    %303 = vector.broadcast %cst_102 : f32 to vector<16x1xf32>
    %304 = arith.addf %302, %303 : vector<16x1xf32>
    %305 = math.rsqrt %304 : vector<16x1xf32>
    %306 = vector.broadcast %305 : vector<16x1xf32> to vector<16x32xf32>
    %307 = arith.mulf %297, %306 : vector<16x32xf32>
    %308 = vector.broadcast %170 : vector<1x32xf32> to vector<16x32xf32>
    %309 = arith.mulf %307, %308 : vector<16x32xf32>
    %310 = vector.broadcast %171 : vector<1x32xf32> to vector<16x32xf32>
    %311 = arith.addf %309, %310 : vector<16x32xf32>
    %312 = arith.truncf %311 : vector<16x32xf32> to vector<16x32xbf16>
    %c0_103 = arith.constant 0 : index
    %c0_104 = arith.constant 0 : index
    %313 = vector.load %arg9[%c0_103, %c0_104] : memref<32x128xbf16, #tpu.memory_space<vmem>>, vector<32x128xbf16>
    %cst_105 = arith.constant dense<0.000000e+00> : vector<16x128xf32>
    %314 = tpu.matmul %312, %313, %cst_105 {dimension_numbers = #tpu.dot_dimension_numbers<[1], [0], [0], [1], [0, 0, 1, 1], [], []>} : vector<16x32xbf16>, vector<32x128xbf16>, vector<16x128xf32> -> vector<16x128xf32>
    %c0_106 = arith.constant 0 : index
    %c0_107 = arith.constant 0 : index
    %315 = vector.load %arg10[%c0_106, %c0_107] : memref<1x128xf32, #tpu.memory_space<vmem>>, vector<1x128xf32>
    %316 = vector.broadcast %315 : vector<1x128xf32> to vector<16x128xf32>
    %317 = arith.addf %314, %316 : vector<16x128xf32>
    %c0_108 = arith.constant 0 : index
    %c0_109 = arith.constant 0 : index
    %318 = vector.load %arg11[%c0_108, %c0_109] : memref<16x128xf32, #tpu.memory_space<vmem>>, vector<16x128xf32>
    tpu.vector_store %arg11[%c0_108, %c0_109], %317 {strides = array<i32>} : memref<16x128xf32, #tpu.memory_space<vmem>>, vector<16x128xf32>,
    return
  }
}

</mosaic_0001>

<llo_original>
// kernel: tpu_custom_call.1
$region0: #{tpu_custom_call.1}
  #allocation0 [shape = 'u32[]', space=smem, size = 0x4, offset = 0x4, fixed_abs, tag = 'smem constant byte address 0x4 - core index']
  #allocation1 [shape = 'u32[72,128]{1,0:T(1,128)}', space=vmem, size = 0x9000, scoped, tag = 'internal scratch']
  %s0 = inlined_call_operand.vmem [shape: f32[16,16], index: 0, kind: input, shape index: {}]
  %s1 = inlined_call_operand.vmem [shape: f32[2,32], index: 1, kind: input, shape index: {}]
  %s2 = inlined_call_operand.hbm [shape: bf16[16,32], index: 2, kind: input, shape index: {}]
  %s3 = inlined_call_operand.vmem [shape: bf16[2,3,32,32], index: 3, kind: input, shape index: {}]
  %s4 = inlined_call_operand.hbm [shape: bf16[2,4,8,32], index: 4, kind: input, shape index: {}]
  %s5 = inlined_call_operand.hbm [shape: bf16[2,32,64], index: 5, kind: input, shape index: {}]
  %s6 = inlined_call_operand.vmem [shape: bf16[2,64,32], index: 6, kind: input, shape index: {}]
  %s7 = inlined_call_operand.vmem [shape: f32[2,9,32], index: 7, kind: input, shape index: {}]
  %s8 = inlined_call_operand.vmem [shape: f32[2,1,64], index: 8, kind: input, shape index: {}]
  %s9 = inlined_call_operand.hbm [shape: bf16[32,128], index: 9, kind: input, shape index: {}]
  %s10 = inlined_call_operand.vmem [shape: f32[1,128], index: 10, kind: input, shape index: {}]
  %s11 = inlined_call_operand.hbm [shape: f32[16,128], index: 11, kind: output, shape index: {}]
  %s12 = sld [smem:[#allocation0]]
  $region70: #{tpu_custom_call.1} parent=0
    _
  %s14 = ssub.s32 1, %s12
  %s15 = scalar_select 0, %s14, %s12
  $region1: #{tpu_custom_call.1} parent=0
    #allocation2 [shape = 'u8[4096]{0}', space=vmem, size = 0x1000, scoped, tag = 'input window, operand 2, single buffered']
    #allocation3 [shape = 's32[1]{0}', space=sflag, size = 0x4, scoped, tag = 'scoped memory for tpu_custom_call.1']
    #allocation4 [shape = 's32[1]{0}', space=sflag, size = 0x4, scoped, tag = 'scoped memory for tpu_custom_call.1']
    #allocation5 [shape = 'u8[16384]{0}', space=vmem, size = 0x4000, scoped, tag = 'input window, operand 4, single buffered']
    #allocation6 [shape = 's32[1]{0}', space=sflag, size = 0x4, scoped, tag = 'scoped memory for tpu_custom_call.1']
    #allocation7 [shape = 'u8[16384]{0}', space=vmem, size = 0x4000, scoped, tag = 'input window, operand 5, single buffered']
    #allocation8 [shape = 'u8[8192]{0}', space=vmem, size = 0x2000, scoped, tag = 'input window, operand 9, single buffered']
    #allocation9 [shape = 's32[1]{0}', space=sflag, size = 0x4, scoped, tag = 'scoped memory for tpu_custom_call.1']
    #allocation10 [shape = 'u8[8192]{0}', space=vmem, size = 0x2000, scoped, tag = 'output window, operand 0, single buffered']
    %16 = vsyncpa [#allocation3], 0
    %17 = vsyncpa [#allocation6], 0
    %18 = vsyncpa [#allocation9], 0
    %19 = vsyncpa [#allocation4], 0
    // Predicated region
    $region2: #{tpu_custom_call.1} parent=1 // pred_check
      _
    $region3: #{tpu_custom_call.1} parent=1 // pred_check_branch
      %21 = sbr.rel (0) target = $region5
    $region4: #{tpu_custom_call.1} parent=1 // pred_region
      _
    $region5: #{tpu_custom_call.1} parent=1 // pred_fallthru
      _
    // Predicated region
    $region6: #{tpu_custom_call.1} parent=1 // pred_check
      _
    $region7: #{tpu_custom_call.1} parent=1 // pred_check_branch
      %23 = sbr.rel (0) target = $region9
    $region8: #{tpu_custom_call.1} parent=1 // pred_region
      _
    $region9: #{tpu_custom_call.1} parent=1 // pred_fallthru
      _
    // Predicated region
    $region10: #{tpu_custom_call.1} parent=1 // pred_check
      _
    $region11: #{tpu_custom_call.1} parent=1 // pred_check_branch
      %25 = sbr.rel (0) target = $region13
    $region12: #{tpu_custom_call.1} parent=1 // pred_region
      %27 = vsyncadd [#allocation3], 0
      %s28 = sshll.u32 %s2, 4
      %s29 = int_to_ptr.hbm [resolvable:$true] %s28
      %s30 = sshll.u32 [#allocation2], 4
      %s31 = int_to_ptr.vmem [resolvable:$true] %s30
      %36 = dma.hbm_to_vmem [thread:$0]  %s29, 128, %s31, [#allocation3], 64, 64, 4
    $region13: #{tpu_custom_call.1} parent=1 // pred_fallthru
      _
    // Predicated region
    $region14: #{tpu_custom_call.1} parent=1 // pred_check
      _
    $region15: #{tpu_custom_call.1} parent=1 // pred_check_branch
      %38 = sbr.rel (0) target = $region17
    $region16: #{tpu_custom_call.1} parent=1 // pred_region
      _
    $region17: #{tpu_custom_call.1} parent=1 // pred_fallthru
      _
    // Predicated region
    $region18: #{tpu_custom_call.1} parent=1 // pred_check
      _
    $region19: #{tpu_custom_call.1} parent=1 // pred_check_branch
      %40 = sbr.rel (0) target = $region21
    $region20: #{tpu_custom_call.1} parent=1 // pred_region
      %42 = vsyncadd [#allocation6], 0
      %s43 = sshll.u32 %s4, 4
      %s44 = int_to_ptr.hbm [resolvable:$true] %s43
      %s45 = sshll.u32 [#allocation5], 4
      %s46 = int_to_ptr.vmem [resolvable:$true] %s45
      %51 = dma.hbm_to_vmem [thread:$0]  %s44, 512, %s46, [#allocation6], 64, 64, 4
    $region21: #{tpu_custom_call.1} parent=1 // pred_fallthru
      _
    // Predicated region
    $region22: #{tpu_custom_call.1} parent=1 // pred_check
      _
    $region23: #{tpu_custom_call.1} parent=1 // pred_check_branch
      %53 = sbr.rel (0) target = $region25
    $region24: #{tpu_custom_call.1} parent=1 // pred_region
      %55 = vsyncadd [#allocation6], 0
      %s56 = sshll.u32 %s5, 4
      %s57 = int_to_ptr.hbm [resolvable:$true] %s56
      %s58 = sshll.u32 [#allocation7], 4
      %s59 = int_to_ptr.vmem [resolvable:$true] %s58
      %64 = dma.hbm_to_vmem [thread:$0]  %s57, 512, %s59, [#allocation6], 64, 64, 4
    $region25: #{tpu_custom_call.1} parent=1 // pred_fallthru
      _
    // Predicated region
    $region26: #{tpu_custom_call.1} parent=1 // pred_check
      _
    $region27: #{tpu_custom_call.1} parent=1 // pred_check_branch
      %66 = sbr.rel (0) target = $region29
    $region28: #{tpu_custom_call.1} parent=1 // pred_region
      _
    $region29: #{tpu_custom_call.1} parent=1 // pred_fallthru
      _
    // Predicated region
    $region30: #{tpu_custom_call.1} parent=1 // pred_check
      _
    $region31: #{tpu_custom_call.1} parent=1 // pred_check_branch
      %68 = sbr.rel (0) target = $region33
    $region32: #{tpu_custom_call.1} parent=1 // pred_region
      _
    $region33: #{tpu_custom_call.1} parent=1 // pred_fallthru
      _
    // Predicated region
    $region34: #{tpu_custom_call.1} parent=1 // pred_check
      _
    $region35: #{tpu_custom_call.1} parent=1 // pred_check_branch
      %70 = sbr.rel (0) target = $region37
    $region36: #{tpu_custom_call.1} parent=1 // pred_region
      _
    $region37: #{tpu_custom_call.1} parent=1 // pred_fallthru
      _
    // Predicated region
    $region38: #{tpu_custom_call.1} parent=1 // pred_check
      _
    $region39: #{tpu_custom_call.1} parent=1 // pred_check_branch
      %72 = sbr.rel (0) target = $region41
    $region40: #{tpu_custom_call.1} parent=1 // pred_region
      %74 = vsyncadd [#allocation9], 0
      %s75 = sshll.u32 %s9, 4
      %s76 = int_to_ptr.hbm [resolvable:$true] %s75
      %s77 = sshll.u32 [#allocation8], 4
      %s78 = int_to_ptr.vmem [resolvable:$true] %s77
      %83 = dma.hbm_to_vmem [thread:$0]  %s76, 256, %s78, [#allocation9], 64, 64, 4
    $region41: #{tpu_custom_call.1} parent=1 // pred_fallthru
      _
    // Predicated region
    $region42: #{tpu_custom_call.1} parent=1 // pred_check
      _
    $region43: #{tpu_custom_call.1} parent=1 // pred_check_branch
      %85 = sbr.rel (0) target = $region45
    $region44: #{tpu_custom_call.1} parent=1 // pred_region
      _
    $region45: #{tpu_custom_call.1} parent=1 // pred_fallthru
      _
    // Predicated region
    $region46: #{tpu_custom_call.1} parent=1 // pred_check
      _
    $region47: #{tpu_custom_call.1} parent=1 // pred_check_branch
      %87 = sbr.rel (0) target = $region49
    $region48: #{tpu_custom_call.1} parent=1 // pred_region
      %89 = dma.done [#allocation3], 128
    $region49: #{tpu_custom_call.1} parent=1 // pred_fallthru
      _
    // Predicated region
    $region50: #{tpu_custom_call.1} parent=1 // pred_check
      _
    $region51: #{tpu_custom_call.1} parent=1 // pred_check_branch
      %91 = sbr.rel (0) target = $region53
    $region52: #{tpu_custom_call.1} parent=1 // pred_region
      %93 = dma.done [#allocation6], 512
    $region53: #{tpu_custom_call.1} parent=1 // pred_fallthru
      _
    // Predicated region
    $region54: #{tpu_custom_call.1} parent=1 // pred_check
      _
    $region55: #{tpu_custom_call.1} parent=1 // pred_check_branch
      %95 = sbr.rel (0) target = $region57
    $region56: #{tpu_custom_call.1} parent=1 // pred_region
      %97 = dma.done [#allocation6], 512
    $region57: #{tpu_custom_call.1} parent=1 // pred_fallthru
      _
    // Predicated region
    $region58: #{tpu_custom_call.1} parent=1 // pred_check
      _
    $region59: #{tpu_custom_call.1} parent=1 // pred_check_branch
      %99 = sbr.rel (0) target = $region61
    $region60: #{tpu_custom_call.1} parent=1 // pred_region
      %101 = dma.done [#allocation9], 256
    $region61: #{tpu_custom_call.1} parent=1 // pred_fallthru
      _
    %v103 = vld [vmem:[%s0] sm:$0xff]
    %v104 = vld [vmem:[%s0 + $0x8] sm:$0xff]
    %v105 = vpack.c.bf16 %v104, %v103
    %v106 = vld [vmem:[#allocation2] sm:$0xf]
    %v107 = vld [vmem:[#allocation2 + $0x4] sm:$0xf]
    %v110 = vunpack.c.l.b16 %v106
    %v111 = vunpack.c.l.b16 %v107
    %v112 = vpack.c.b16 %v111, %v110
    %vm114 = vcmask 130048
    %v116 = vsel %vm114, %v105, 0
    %118 = vmatpush.bf16.msra.mxu0 0
    %119 = vmatpush.bf16.msra.mxu0 0
    %120 = vmatpush.bf16.msra.mxu0 0
    %121 = vmatpush.bf16.msra.mxu0 0
    %122 = vmatpush.bf16.msra.mxu0 0
    %123 = vmatpush.bf16.msra.mxu0 0
    %124 = vmatpush.bf16.msra.mxu0 0
    %125 = vmatpush.bf16.msra.mxu0 %v112
    %126 = vmatmul.bf16.gmra.mxu0 %v116
    %v127 = vpop.f32.mrf.mxu0
    %v128 = vadd.f32 0.0, %v127
    %v129 = vpop.f32.mrf.mxu0
    %v130 = vadd.f32 0.0, %v129
    %131 = vdwg.mxu0
    %v132 = vld [vmem:[%s1] sm:$0x3]
    %v134 = vrot.slane %v132, 1
    %v135 = vperm.slane %v132, 0
    %v136 = vperm.slane %v134, 0
    %v139 = vadd.f32 %v128, %v135
    %v140 = vadd.f32 %v130, %v136
    %v141 = vld [vmem:[%s7] sm:$0xff]
    %v142 = vld [vmem:[%s7 + $0x8] sm:$0x1]
    %v143 = vpack.c.bf16 %v140, %v139
    %v144 = vld [vmem:[%s3] sm:$0xf]
    %v145 = vld [vmem:[%s3 + $0x4] sm:$0xf]
    %v146 = vld [vmem:[%s3 + $0x8] sm:$0xf]
    %v147 = vld [vmem:[%s3 + $0xc] sm:$0xf]
    %v148 = vperm.slane %v141, 0
    %v153 = vunpack.c.l.b16 %v144
    %v154 = vunpack.c.l.b16 %v145
    %v155 = vunpack.c.l.b16 %v146
    %v156 = vunpack.c.l.b16 %v147
    %v157 = vpack.c.b16 %v154, %v153
    %v158 = vpack.c.b16 %v156, %v155
    %vm161 = vcmask 261120
    %v163 = vsel %vm161, %v143, 0
    %165 = vmatpush.bf16.msra.mxu0 0
    %166 = vmatpush.bf16.msra.mxu0 0
    %167 = vmatpush.bf16.msra.mxu0 0
    %168 = vmatpush.bf16.msra.mxu0 0
    %169 = vmatpush.bf16.msra.mxu0 0
    %170 = vmatpush.bf16.msra.mxu0 0
    %171 = vmatpush.bf16.msra.mxu0 %v158
    %172 = vmatpush.bf16.msra.mxu0 %v157
    %173 = vmatmul.bf16.gmra.mxu0 %v163
    %v174 = vpop.f32.mrf.mxu0
    %v175 = vadd.f32 %v148, %v174
    %v176 = vpop.f32.mrf.mxu0
    %v177 = vadd.f32 %v148, %v176
    %178 = vdwg.mxu0
    %s179 = scalar_lea.vmem %s3, 16
    %v180 = vld [vmem:[%s179] sm:$0xf]
    %v181 = vld [vmem:[%s179 + $0x4] sm:$0xf]
    %v182 = vld [vmem:[%s179 + $0x8] sm:$0xf]
    %v183 = vld [vmem:[%s179 + $0xc] sm:$0xf]
    %v184 = vperm.slane %v141, 1
    %v189 = vunpack.c.l.b16 %v180
    %v190 = vunpack.c.l.b16 %v181
    %v191 = vunpack.c.l.b16 %v182
    %v192 = vunpack.c.l.b16 %v183
    %v193 = vpack.c.b16 %v190, %v189
    %v194 = vpack.c.b16 %v192, %v191
    %197 = vmatpush.bf16.msra.mxu0 0
    %198 = vmatpush.bf16.msra.mxu0 0
    %199 = vmatpush.bf16.msra.mxu0 0
    %200 = vmatpush.bf16.msra.mxu0 0
    %201 = vmatpush.bf16.msra.mxu0 0
    %202 = vmatpush.bf16.msra.mxu0 0
    %203 = vmatpush.bf16.msra.mxu0 %v194
    %204 = vmatpush.bf16.msra.mxu0 %v193
    %205 = vmatmul.bf16.gmra.mxu0 %v163
    %v206 = vpop.f32.mrf.mxu0
    %v207 = vadd.f32 %v184, %v206
    %v208 = vpop.f32.mrf.mxu0
    %v209 = vadd.f32 %v184, %v208
    %210 = vdwg.mxu0
    %s211 = scalar_lea.vmem %s3, 32
    %v212 = vld [vmem:[%s211] sm:$0xf]
    %v213 = vld [vmem:[%s211 + $0x4] sm:$0xf]
    %v214 = vld [vmem:[%s211 + $0x8] sm:$0xf]
    %v215 = vld [vmem:[%s211 + $0xc] sm:$0xf]
    %v216 = vperm.slane %v141, 2
    %v221 = vunpack.c.l.b16 %v212
    %v222 = vunpack.c.l.b16 %v213
    %v223 = vunpack.c.l.b16 %v214
    %v224 = vunpack.c.l.b16 %v215
    %v225 = vpack.c.b16 %v222, %v221
    %v226 = vpack.c.b16 %v224, %v223
    %229 = vmatpush.bf16.msra.mxu0 0
    %230 = vmatpush.bf16.msra.mxu0 0
    %231 = vmatpush.bf16.msra.mxu0 0
    %232 = vmatpush.bf16.msra.mxu0 0
    %233 = vmatpush.bf16.msra.mxu0 0
    %234 = vmatpush.bf16.msra.mxu0 0
    %235 = vmatpush.bf16.msra.mxu0 %v226
    %236 = vmatpush.bf16.msra.mxu0 %v225
    %237 = vmatmul.bf16.gmra.mxu0 %v163
    %v238 = vpop.f32.mrf.mxu0
    %v239 = vadd.f32 %v216, %v238
    %v240 = vpop.f32.mrf.mxu0
    %v241 = vadd.f32 %v216, %v240
    %242 = vdwg.mxu0
    %v243 = vmul.f32 %v175, 0.35355338
    %v244 = vmul.f32 %v177, 0.35355338
    %247 = vrot.lane.b32.xlu0 %v243, 120
    %v248 = vpop.permute.xlu0 %247
    %249 = vrot.lane.b32.xlu0 %v244, 120
    %v250 = vpop.permute.xlu0 %249
    %253 = vrot.lane.b32.xlu0 %v243, 112
    %v254 = vpop.permute.xlu0 %253
    %255 = vrot.lane.b32.xlu0 %v244, 112
    %v256 = vpop.permute.xlu0 %255
    %259 = vrot.lane.b32.xlu0 %v243, 104
    %v260 = vpop.permute.xlu0 %259
    %261 = vrot.lane.b32.xlu0 %v244, 104
    %v262 = vpop.permute.xlu0 %261
    %v265 = vpack.c.bf16 %v243, %v243
    %v266 = vpack.c.bf16 %v244, %v244
    %v267 = vpack.c.bf16 %v248, %v248
    %v268 = vpack.c.bf16 %v250, %v250
    %v269 = vpack.c.bf16 %v254, %v254
    %v270 = vpack.c.bf16 %v256, %v256
    %v271 = vpack.c.bf16 %v260, %v260
    %v272 = vpack.c.bf16 %v262, %v262
    %275 = vrot.lane.b32.xlu0 %v207, 120
    %v276 = vpop.permute.xlu0 %275
    %277 = vrot.lane.b32.xlu0 %v209, 120
    %v278 = vpop.permute.xlu0 %277
    %281 = vrot.lane.b32.xlu0 %v207, 112
    %v282 = vpop.permute.xlu0 %281
    %283 = vrot.lane.b32.xlu0 %v209, 112
    %v284 = vpop.permute.xlu0 %283
    %287 = vrot.lane.b32.xlu0 %v207, 104
    %v288 = vpop.permute.xlu0 %287
    %289 = vrot.lane.b32.xlu0 %v209, 104
    %v290 = vpop.permute.xlu0 %289
    %v293 = vpack.c.bf16 %v207, %v207
    %v294 = vpack.c.bf16 %v209, %v209
    %v295 = vpack.c.bf16 %v276, %v276
    %v296 = vpack.c.bf16 %v278, %v278
    %v297 = vpack.c.bf16 %v282, %v282
    %v298 = vpack.c.bf16 %v284, %v284
    %v299 = vpack.c.bf16 %v288, %v288
    %v300 = vpack.c.bf16 %v290, %v290
    %303 = vrot.lane.b32.xlu0 %v239, 120
    %v304 = vpop.permute.xlu0 %303
    %305 = vrot.lane.b32.xlu0 %v241, 120
    %v306 = vpop.permute.xlu0 %305
    %309 = vrot.lane.b32.xlu0 %v239, 112
    %v310 = vpop.permute.xlu0 %309
    %311 = vrot.lane.b32.xlu0 %v241, 112
    %v312 = vpop.permute.xlu0 %311
    %315 = vrot.lane.b32.xlu0 %v239, 104
    %v316 = vpop.permute.xlu0 %315
    %317 = vrot.lane.b32.xlu0 %v241, 104
    %v318 = vpop.permute.xlu0 %317
    %v321 = vpack.c.bf16 %v239, %v239
    %v322 = vpack.c.bf16 %v241, %v241
    %v323 = vpack.c.bf16 %v304, %v304
    %v324 = vpack.c.bf16 %v306, %v306
    %v325 = vpack.c.bf16 %v310, %v310
    %v326 = vpack.c.bf16 %v312, %v312
    %v327 = vpack.c.bf16 %v316, %v316
    %v328 = vpack.c.bf16 %v318, %v318
    %vm329 = vcmask 64512
    %v331 = vsel %vm329, %v265, 0
    %v334 = vsel %vm329, %v293, 0
    %336 = vmatpush.bf16.xpose.msra.mxu0 0
    %337 = vmatpush.bf16.xpose.msra.mxu0 0
    %338 = vmatpush.bf16.xpose.msra.mxu0 0
    %339 = vmatpush.bf16.xpose.msra.mxu0 0
    %340 = vmatpush.bf16.xpose.msra.mxu0 0
    %341 = vmatpush.bf16.xpose.msra.mxu0 0
    %342 = vmatpush.bf16.xpose.msra.mxu0 0
    %343 = vmatpush.bf16.xpose.msra.mxu0 %v334
    %344 = vmatmul.bf16.gmra.mxu0 %v331
    %v345 = vpop.f32.mrf.mxu0
    %v346 = vadd.f32 0.0, %v345
    %v347 = vpop.f32.mrf.mxu0
    %348 = vdwg.mxu0
    %v350 = vsel %vm329, %v266, 0
    %v353 = vsel %vm329, %v294, 0
    %355 = vmatpush.bf16.xpose.msra.mxu0 0
    %356 = vmatpush.bf16.xpose.msra.mxu0 0
    %357 = vmatpush.bf16.xpose.msra.mxu0 0
    %358 = vmatpush.bf16.xpose.msra.mxu0 0
    %359 = vmatpush.bf16.xpose.msra.mxu0 0
    %360 = vmatpush.bf16.xpose.msra.mxu0 0
    %361 = vmatpush.bf16.xpose.msra.mxu0 0
    %362 = vmatpush.bf16.xpose.msra.mxu0 %v353
    %363 = vmatmul.bf16.gmra.mxu0 %v350
    %v364 = vpop.f32.mrf.mxu0
    %v365 = vadd.f32 0.0, %v364
    %v366 = vpop.f32.mrf.mxu0
    %367 = vdwg.mxu0
    %v369 = vsel %vm329, %v267, 0
    %v372 = vsel %vm329, %v295, 0
    %374 = vmatpush.bf16.xpose.msra.mxu0 0
    %375 = vmatpush.bf16.xpose.msra.mxu0 0
    %376 = vmatpush.bf16.xpose.msra.mxu0 0
    %377 = vmatpush.bf16.xpose.msra.mxu0 0
    %378 = vmatpush.bf16.xpose.msra.mxu0 0
    %379 = vmatpush.bf16.xpose.msra.mxu0 0
    %380 = vmatpush.bf16.xpose.msra.mxu0 0
    %381 = vmatpush.bf16.xpose.msra.mxu0 %v372
    %382 = vmatmul.bf16.gmra.mxu0 %v369
    %v383 = vpop.f32.mrf.mxu0
    %v384 = vadd.f32 0.0, %v383
    %v385 = vpop.f32.mrf.mxu0
    %386 = vdwg.mxu0
    %v388 = vsel %vm329, %v268, 0
    %v391 = vsel %vm329, %v296, 0
    %393 = vmatpush.bf16.xpose.msra.mxu0 0
    %394 = vmatpush.bf16.xpose.msra.mxu0 0
    %395 = vmatpush.bf16.xpose.msra.mxu0 0
    %396 = vmatpush.bf16.xpose.msra.mxu0 0
    %397 = vmatpush.bf16.xpose.msra.mxu0 0
    %398 = vmatpush.bf16.xpose.msra.mxu0 0
    %399 = vmatpush.bf16.xpose.msra.mxu0 0
    %400 = vmatpush.bf16.xpose.msra.mxu0 %v391
    %401 = vmatmul.bf16.gmra.mxu0 %v388
    %v402 = vpop.f32.mrf.mxu0
    %v403 = vadd.f32 0.0, %v402
    %v404 = vpop.f32.mrf.mxu0
    %405 = vdwg.mxu0
    %v407 = vsel %vm329, %v269, 0
    %v410 = vsel %vm329, %v297, 0
    %412 = vmatpush.bf16.xpose.msra.mxu0 0
    %413 = vmatpush.bf16.xpose.msra.mxu0 0
    %414 = vmatpush.bf16.xpose.msra.mxu0 0
    %415 = vmatpush.bf16.xpose.msra.mxu0 0
    %416 = vmatpush.bf16.xpose.msra.mxu0 0
    %417 = vmatpush.bf16.xpose.msra.mxu0 0
    %418 = vmatpush.bf16.xpose.msra.mxu0 0
    %419 = vmatpush.bf16.xpose.msra.mxu0 %v410
    %420 = vmatmul.bf16.gmra.mxu0 %v407
    %v421 = vpop.f32.mrf.mxu0
    %v422 = vadd.f32 0.0, %v421
    %v423 = vpop.f32.mrf.mxu0
    %424 = vdwg.mxu0
    %v426 = vsel %vm329, %v270, 0
    %v429 = vsel %vm329, %v298, 0
    %431 = vmatpush.bf16.xpose.msra.mxu0 0
    %432 = vmatpush.bf16.xpose.msra.mxu0 0
    %433 = vmatpush.bf16.xpose.msra.mxu0 0
    %434 = vmatpush.bf16.xpose.msra.mxu0 0
    %435 = vmatpush.bf16.xpose.msra.mxu0 0
    %436 = vmatpush.bf16.xpose.msra.mxu0 0
    %437 = vmatpush.bf16.xpose.msra.mxu0 0
    %438 = vmatpush.bf16.xpose.msra.mxu0 %v429
    %439 = vmatmul.bf16.gmra.mxu0 %v426
    %v440 = vpop.f32.mrf.mxu0
    %v441 = vadd.f32 0.0, %v440
    %v442 = vpop.f32.mrf.mxu0
    %443 = vdwg.mxu0
    %v445 = vsel %vm329, %v271, 0
    %v448 = vsel %vm329, %v299, 0
    %450 = vmatpush.bf16.xpose.msra.mxu0 0
    %451 = vmatpush.bf16.xpose.msra.mxu0 0
    %452 = vmatpush.bf16.xpose.msra.mxu0 0
    %453 = vmatpush.bf16.xpose.msra.mxu0 0
    %454 = vmatpush.bf16.xpose.msra.mxu0 0
    %455 = vmatpush.bf16.xpose.msra.mxu0 0
    %456 = vmatpush.bf16.xpose.msra.mxu0 0
    %457 = vmatpush.bf16.xpose.msra.mxu0 %v448
    %458 = vmatmul.bf16.gmra.mxu0 %v445
    %v459 = vpop.f32.mrf.mxu0
    %v460 = vadd.f32 0.0, %v459
    %v461 = vpop.f32.mrf.mxu0
    %462 = vdwg.mxu0
    %v464 = vsel %vm329, %v272, 0
    %v467 = vsel %vm329, %v300, 0
    %469 = vmatpush.bf16.xpose.msra.mxu0 0
    %470 = vmatpush.bf16.xpose.msra.mxu0 0
    %471 = vmatpush.bf16.xpose.msra.mxu0 0
    %472 = vmatpush.bf16.xpose.msra.mxu0 0
    %473 = vmatpush.bf16.xpose.msra.mxu0 0
    %474 = vmatpush.bf16.xpose.msra.mxu0 0
    %475 = vmatpush.bf16.xpose.msra.mxu0 0
    %476 = vmatpush.bf16.xpose.msra.mxu0 %v467
    %477 = vmatmul.bf16.gmra.mxu0 %v464
    %v478 = vpop.f32.mrf.mxu0
    %v479 = vadd.f32 0.0, %v478
    %v480 = vpop.f32.mrf.mxu0
    %481 = vdwg.mxu0
    %v482 = vsel %vm329, %v346, -inf
    %483 = vmax.xlane.f32.xlu0 %v482
    %v484 = vpop.xlane.xlu0 %483
    %v485 = vsel %vm329, %v365, -inf
    %486 = vmax.xlane.f32.xlu0 %v485
    %v487 = vpop.xlane.xlu0 %486
    %v488 = vsel %vm329, %v384, -inf
    %489 = vmax.xlane.f32.xlu0 %v488
    %v490 = vpop.xlane.xlu0 %489
    %v491 = vsel %vm329, %v403, -inf
    %492 = vmax.xlane.f32.xlu0 %v491
    %v493 = vpop.xlane.xlu0 %492
    %v494 = vsel %vm329, %v422, -inf
    %495 = vmax.xlane.f32.xlu0 %v494
    %v496 = vpop.xlane.xlu0 %495
    %v497 = vsel %vm329, %v441, -inf
    %498 = vmax.xlane.f32.xlu0 %v497
    %v499 = vpop.xlane.xlu0 %498
    %v500 = vsel %vm329, %v460, -inf
    %501 = vmax.xlane.f32.xlu0 %v500
    %v502 = vpop.xlane.xlu0 %501
    %v503 = vsel %vm329, %v479, -inf
    %504 = vmax.xlane.f32.xlu0 %v503
    %v505 = vpop.xlane.xlu0 %504
    %v506 = vsub.f32 %v346, %v484
    %v507 = vsub.f32 %v365, %v487
    %v508 = vsub.f32 %v384, %v490
    %v509 = vsub.f32 %v403, %v493
    %v510 = vsub.f32 %v422, %v496
    %v511 = vsub.f32 %v441, %v499
    %v512 = vsub.f32 %v460, %v502
    %v513 = vsub.f32 %v479, %v505
    %v514 = vmul.f32 %v506, 1.442695
    %v515 = vpow.pop %v514
    %v516 = vmul.f32 %v507, 1.442695
    %v517 = vpow.pop %v516
    %v518 = vmul.f32 %v508, 1.442695
    %v519 = vpow.pop %v518
    %v520 = vmul.f32 %v509, 1.442695
    %v521 = vpow.pop %v520
    %v522 = vmul.f32 %v510, 1.442695
    %v523 = vpow.pop %v522
    %v524 = vmul.f32 %v511, 1.442695
    %v525 = vpow.pop %v524
    %v526 = vmul.f32 %v512, 1.442695
    %v527 = vpow.pop %v526
    %v528 = vmul.f32 %v513, 1.442695
    %v529 = vpow.pop %v528
    %v530 = vsel %vm329, %v515, 0.0
    %531 = vadd.xlane.f32.xlu0 %v530
    %v532 = vpop.xlane.xlu0 %531
    %v533 = vsel %vm329, %v517, 0.0
    %534 = vadd.xlane.f32.xlu0 %v533
    %v535 = vpop.xlane.xlu0 %534
    %v536 = vsel %vm329, %v519, 0.0
    %537 = vadd.xlane.f32.xlu0 %v536
    %v538 = vpop.xlane.xlu0 %537
    %v539 = vsel %vm329, %v521, 0.0
    %540 = vadd.xlane.f32.xlu0 %v539
    %v541 = vpop.xlane.xlu0 %540
    %v542 = vsel %vm329, %v523, 0.0
    %543 = vadd.xlane.f32.xlu0 %v542
    %v544 = vpop.xlane.xlu0 %543
    %v545 = vsel %vm329, %v525, 0.0
    %546 = vadd.xlane.f32.xlu0 %v545
    %v547 = vpop.xlane.xlu0 %546
    %v548 = vsel %vm329, %v527, 0.0
    %549 = vadd.xlane.f32.xlu0 %v548
    %v550 = vpop.xlane.xlu0 %549
    %v551 = vsel %vm329, %v529, 0.0
    %552 = vadd.xlane.f32.xlu0 %v551
    %v553 = vpop.xlane.xlu0 %552
    %v554 = vrcp.pop %v532
    %v555 = vrcp.pop %v535
    %v556 = vrcp.pop %v538
    %v557 = vrcp.pop %v541
    %v558 = vrcp.pop %v544
    %v559 = vrcp.pop %v547
    %v560 = vrcp.pop %v550
    %v561 = vrcp.pop %v553
    %v562 = vmul.f32 %v515, %v554
    %v563 = vmul.f32 %v517, %v555
    %v564 = vmul.f32 %v519, %v556
    %v565 = vmul.f32 %v521, %v557
    %v566 = vmul.f32 %v523, %v558
    %v567 = vmul.f32 %v525, %v559
    %v568 = vmul.f32 %v527, %v560
    %v569 = vmul.f32 %v529, %v561
    %v570 = vpack.c.bf16 %v562, %v562
    %v571 = vpack.c.bf16 %v563, %v563
    %v572 = vpack.c.bf16 %v564, %v564
    %v573 = vpack.c.bf16 %v565, %v565
    %v574 = vpack.c.bf16 %v566, %v566
    %v575 = vpack.c.bf16 %v567, %v567
    %v576 = vpack.c.bf16 %v568, %v568
    %v577 = vpack.c.bf16 %v569, %v569
    %v579 = vsel %vm329, %v570, 0
    %vm581 = vcmask 1043456
    %v583 = vsel %vm581, %v321, 0
    %585 = vmatpush.bf16.msra.mxu0 0
    %586 = vmatpush.bf16.msra.mxu0 0
    %587 = vmatpush.bf16.msra.mxu0 0
    %588 = vmatpush.bf16.msra.mxu0 0
    %589 = vmatpush.bf16.msra.mxu0 0
    %590 = vmatpush.bf16.msra.mxu0 0
    %591 = vmatpush.bf16.msra.mxu0 0
    %592 = vmatpush.bf16.msra.mxu0 %v583
    %593 = vmatmul.bf16.gmra.mxu0 %v579
    %v594 = vpop.f32.mrf.mxu0
    %v595 = vadd.f32 0.0, %v594
    %v596 = vpop.f32.mrf.mxu0
    %597 = vdwg.mxu0
    %v599 = vsel %vm329, %v571, 0
    %v602 = vsel %vm581, %v322, 0
    %604 = vmatpush.bf16.msra.mxu0 0
    %605 = vmatpush.bf16.msra.mxu0 0
    %606 = vmatpush.bf16.msra.mxu0 0
    %607 = vmatpush.bf16.msra.mxu0 0
    %608 = vmatpush.bf16.msra.mxu0 0
    %609 = vmatpush.bf16.msra.mxu0 0
    %610 = vmatpush.bf16.msra.mxu0 0
    %611 = vmatpush.bf16.msra.mxu0 %v602
    %612 = vmatmul.bf16.gmra.mxu0 %v599
    %v613 = vpop.f32.mrf.mxu0
    %v614 = vadd.f32 0.0, %v613
    %v615 = vpop.f32.mrf.mxu0
    %616 = vdwg.mxu0
    %v618 = vsel %vm329, %v572, 0
    %v621 = vsel %vm581, %v323, 0
    %623 = vmatpush.bf16.msra.mxu0 0
    %624 = vmatpush.bf16.msra.mxu0 0
    %625 = vmatpush.bf16.msra.mxu0 0
    %626 = vmatpush.bf16.msra.mxu0 0
    %627 = vmatpush.bf16.msra.mxu0 0
    %628 = vmatpush.bf16.msra.mxu0 0
    %629 = vmatpush.bf16.msra.mxu0 0
    %630 = vmatpush.bf16.msra.mxu0 %v621
    %631 = vmatmul.bf16.gmra.mxu0 %v618
    %v632 = vpop.f32.mrf.mxu0
    %v633 = vadd.f32 0.0, %v632
    %v634 = vpop.f32.mrf.mxu0
    %635 = vdwg.mxu0
    %v637 = vsel %vm329, %v573, 0
    %v640 = vsel %vm581, %v324, 0
    %642 = vmatpush.bf16.msra.mxu0 0
    %643 = vmatpush.bf16.msra.mxu0 0
    %644 = vmatpush.bf16.msra.mxu0 0
    %645 = vmatpush.bf16.msra.mxu0 0
    %646 = vmatpush.bf16.msra.mxu0 0
    %647 = vmatpush.bf16.msra.mxu0 0
    %648 = vmatpush.bf16.msra.mxu0 0
    %649 = vmatpush.bf16.msra.mxu0 %v640
    %650 = vmatmul.bf16.gmra.mxu0 %v637
    %v651 = vpop.f32.mrf.mxu0
    %v652 = vadd.f32 0.0, %v651
    %v653 = vpop.f32.mrf.mxu0
    %654 = vdwg.mxu0
    %v656 = vsel %vm329, %v574, 0
    %v659 = vsel %vm581, %v325, 0
    %661 = vmatpush.bf16.msra.mxu0 0
    %662 = vmatpush.bf16.msra.mxu0 0
    %663 = vmatpush.bf16.msra.mxu0 0
    %664 = vmatpush.bf16.msra.mxu0 0
    %665 = vmatpush.bf16.msra.mxu0 0
    %666 = vmatpush.bf16.msra.mxu0 0
    %667 = vmatpush.bf16.msra.mxu0 0
    %668 = vmatpush.bf16.msra.mxu0 %v659
    %669 = vmatmul.bf16.gmra.mxu0 %v656
    %v670 = vpop.f32.mrf.mxu0
    %v671 = vadd.f32 0.0, %v670
    %v672 = vpop.f32.mrf.mxu0
    %673 = vdwg.mxu0
    %v675 = vsel %vm329, %v575, 0
    %v678 = vsel %vm581, %v326, 0
    %680 = vmatpush.bf16.msra.mxu0 0
    %681 = vmatpush.bf16.msra.mxu0 0
    %682 = vmatpush.bf16.msra.mxu0 0
    %683 = vmatpush.bf16.msra.mxu0 0
    %684 = vmatpush.bf16.msra.mxu0 0
    %685 = vmatpush.bf16.msra.mxu0 0
    %686 = vmatpush.bf16.msra.mxu0 0
    %687 = vmatpush.bf16.msra.mxu0 %v678
    %688 = vmatmul.bf16.gmra.mxu0 %v675
    %v689 = vpop.f32.mrf.mxu0
    %v690 = vadd.f32 0.0, %v689
    %v691 = vpop.f32.mrf.mxu0
    %692 = vdwg.mxu0
    %v694 = vsel %vm329, %v576, 0
    %v697 = vsel %vm581, %v327, 0
    %699 = vmatpush.bf16.msra.mxu0 0
    %700 = vmatpush.bf16.msra.mxu0 0
    %701 = vmatpush.bf16.msra.mxu0 0
    %702 = vmatpush.bf16.msra.mxu0 0
    %703 = vmatpush.bf16.msra.mxu0 0
    %704 = vmatpush.bf16.msra.mxu0 0
    %705 = vmatpush.bf16.msra.mxu0 0
    %706 = vmatpush.bf16.msra.mxu0 %v697
    %707 = vmatmul.bf16.gmra.mxu0 %v694
    %v708 = vpop.f32.mrf.mxu0
    %v709 = vadd.f32 0.0, %v708
    %v710 = vpop.f32.mrf.mxu0
    %711 = vdwg.mxu0
    %v713 = vsel %vm329, %v577, 0
    %v716 = vsel %vm581, %v328, 0
    %718 = vmatpush.bf16.msra.mxu0 0
    %719 = vmatpush.bf16.msra.mxu0 0
    %720 = vmatpush.bf16.msra.mxu0 0
    %721 = vmatpush.bf16.msra.mxu0 0
    %722 = vmatpush.bf16.msra.mxu0 0
    %723 = vmatpush.bf16.msra.mxu0 0
    %724 = vmatpush.bf16.msra.mxu0 0
    %725 = vmatpush.bf16.msra.mxu0 %v716
    %726 = vmatmul.bf16.gmra.mxu0 %v713
    %v727 = vpop.f32.mrf.mxu0
    %v728 = vadd.f32 0.0, %v727
    %v729 = vpop.f32.mrf.mxu0
    %730 = vdwg.mxu0
    %v731 = vpack.c.bf16 %v595, %v595
    %v732 = vpack.c.bf16 %v614, %v614
    %v733 = vpack.c.bf16 %v633, %v633
    %v734 = vpack.c.bf16 %v652, %v652
    %v735 = vpack.c.bf16 %v671, %v671
    %v736 = vpack.c.bf16 %v690, %v690
    %v737 = vpack.c.bf16 %v709, %v709
    %v738 = vpack.c.bf16 %v728, %v728
    %v739 = vld [vmem:[#allocation5] sm:$0xf]
    %v740 = vld [vmem:[#allocation5 + $0x4] sm:$0xf]
    %v741 = vld [vmem:[#allocation5 + $0x8] sm:$0xf]
    %v742 = vld [vmem:[#allocation5 + $0xc] sm:$0xf]
    %v745 = vunpack.c.l.b16 %v731
    %v746 = vunpack.c.l.b16 %v732
    %v747 = vpack.c.b16 %v746, %v745
    %v749 = vsel %vm329, %v747, 0
    %v752 = vsel %vm581, %v739, 0
    %754 = vmatpush.bf16.msra.mxu0 0
    %755 = vmatpush.bf16.msra.mxu0 0
    %756 = vmatpush.bf16.msra.mxu0 0
    %757 = vmatpush.bf16.msra.mxu0 0
    %758 = vmatpush.bf16.msra.mxu0 0
    %759 = vmatpush.bf16.msra.mxu0 0
    %760 = vmatpush.bf16.msra.mxu0 0
    %761 = vmatpush.bf16.msra.mxu0 %v752
    %762 = vmatmul.bf16.gmra.mxu0 %v749
    %v763 = vpop.f32.mrf.mxu0
    %v764 = vadd.f32 0.0, %v763
    %v765 = vpop.f32.mrf.mxu0
    %v766 = vadd.f32 0.0, %v765
    %767 = vdwg.mxu0
    %v770 = vunpack.c.l.b16 %v733
    %v771 = vunpack.c.l.b16 %v734
    %v772 = vpack.c.b16 %v771, %v770
    %v774 = vsel %vm329, %v772, 0
    %v777 = vsel %vm581, %v740, 0
    %779 = vmatpush.bf16.msra.mxu0 0
    %780 = vmatpush.bf16.msra.mxu0 0
    %781 = vmatpush.bf16.msra.mxu0 0
    %782 = vmatpush.bf16.msra.mxu0 0
    %783 = vmatpush.bf16.msra.mxu0 0
    %784 = vmatpush.bf16.msra.mxu0 0
    %785 = vmatpush.bf16.msra.mxu0 0
    %786 = vmatpush.bf16.msra.mxu0 %v777
    %787 = vmatmul.bf16.gmra.mxu0 %v774
    %v788 = vpop.f32.mrf.mxu0
    %v789 = vadd.f32 0.0, %v788
    %v790 = vpop.f32.mrf.mxu0
    %v791 = vadd.f32 0.0, %v790
    %792 = vdwg.mxu0
    %v795 = vunpack.c.l.b16 %v735
    %v796 = vunpack.c.l.b16 %v736
    %v797 = vpack.c.b16 %v796, %v795
    %v799 = vsel %vm329, %v797, 0
    %v802 = vsel %vm581, %v741, 0
    %804 = vmatpush.bf16.msra.mxu0 0
    %805 = vmatpush.bf16.msra.mxu0 0
    %806 = vmatpush.bf16.msra.mxu0 0
    %807 = vmatpush.bf16.msra.mxu0 0
    %808 = vmatpush.bf16.msra.mxu0 0
    %809 = vmatpush.bf16.msra.mxu0 0
    %810 = vmatpush.bf16.msra.mxu0 0
    %811 = vmatpush.bf16.msra.mxu0 %v802
    %812 = vmatmul.bf16.gmra.mxu0 %v799
    %v813 = vpop.f32.mrf.mxu0
    %v814 = vadd.f32 0.0, %v813
    %v815 = vpop.f32.mrf.mxu0
    %v816 = vadd.f32 0.0, %v815
    %817 = vdwg.mxu0
    %v820 = vunpack.c.l.b16 %v737
    %v821 = vunpack.c.l.b16 %v738
    %v822 = vpack.c.b16 %v821, %v820
    %v824 = vsel %vm329, %v822, 0
    %v827 = vsel %vm581, %v742, 0
    %829 = vmatpush.bf16.msra.mxu0 0
    %830 = vmatpush.bf16.msra.mxu0 0
    %831 = vmatpush.bf16.msra.mxu0 0
    %832 = vmatpush.bf16.msra.mxu0 0
    %833 = vmatpush.bf16.msra.mxu0 0
    %834 = vmatpush.bf16.msra.mxu0 0
    %835 = vmatpush.bf16.msra.mxu0 0
    %836 = vmatpush.bf16.msra.mxu0 %v827
    %837 = vmatmul.bf16.gmra.mxu0 %v824
    %v838 = vpop.f32.mrf.mxu0
    %v839 = vadd.f32 0.0, %v838
    %v840 = vpop.f32.mrf.mxu0
    %v841 = vadd.f32 0.0, %v840
    %842 = vdwg.mxu0
    %v843 = vadd.f32 %v764, %v789
    %v844 = vadd.f32 %v766, %v791
    %v845 = vadd.f32 %v843, %v814
    %v846 = vadd.f32 %v844, %v816
    %v847 = vadd.f32 %v845, %v839
    %v848 = vadd.f32 %v846, %v841
    %v849 = vperm.slane %v141, 3
    %v850 = vadd.f32 %v847, %v849
    %v851 = vadd.f32 %v848, %v849
    %v852 = vadd.f32 %v139, %v850
    %v853 = vadd.f32 %v140, %v851
    %v854 = vsel %vm161, %v852, 0.0
    %855 = vadd.xlane.f32.xlu0 %v854
    %v856 = vpop.xlane.xlu0 %855
    %v857 = vsel %vm161, %v853, 0.0
    %858 = vadd.xlane.f32.xlu0 %v857
    %v859 = vpop.xlane.xlu0 %858
    %v860 = vrcp.pop 32.0
    %v861 = vmul.f32 32.0, %v860
    %v862 = vsub.f32 1.0, %v861
    %v863 = vmul.f32 %v860, %v862
    %v864 = vadd.f32 %v860, %v863
    %vm865 = vweird.f32 %v860
    %v866 = vsel %vm865, %v860, %v864
    %v867 = vmul.f32 %v856, %v866
    %v868 = vmul.f32 %v859, %v866
    %v869 = vsub.f32 %v852, %v867
    %v870 = vsub.f32 %v853, %v868
    %v871 = vmul.f32 %v869, %v869
    %v872 = vmul.f32 %v870, %v870
    %v873 = vsel %vm161, %v871, 0.0
    %874 = vadd.xlane.f32.xlu0 %v873
    %v875 = vpop.xlane.xlu0 %874
    %v876 = vsel %vm161, %v872, 0.0
    %877 = vadd.xlane.f32.xlu0 %v876
    %v878 = vpop.xlane.xlu0 %877
    %v879 = vmul.f32 %v875, %v866
    %v880 = vmul.f32 %v878, %v866
    %v881 = vadd.f32 %v879, 1e-05
    %v882 = vadd.f32 %v880, 1e-05
    %v883 = vrsqrt.pop %v881
    %v884 = vmul.f32 %v883, %v881
    %v885 = vmul.f32 %v884, %v883
    %v886 = vmul.f32 0.5, %v885
    %v887 = vsub.f32 1.5, %v886
    %v888 = vmul.f32 %v883, %v887
    %vm889 = vweird.f32 %v881
    %vm890 = vweird.f32 %v883
    %vm891 = vmor %vm889, %vm890
    %v892 = vsel %vm891, %v883, %v888
    %v893 = vrsqrt.pop %v882
    %v894 = vmul.f32 %v893, %v882
    %v895 = vmul.f32 %v894, %v893
    %v896 = vmul.f32 0.5, %v895
    %v897 = vsub.f32 1.5, %v896
    %v898 = vmul.f32 %v893, %v897
    %vm899 = vweird.f32 %v882
    %vm900 = vweird.f32 %v893
    %vm901 = vmor %vm899, %vm900
    %v902 = vsel %vm901, %v893, %v898
    %v903 = vmul.f32 %v869, %v892
    %v904 = vmul.f32 %v870, %v902
    %v905 = vperm.slane %v141, 5
    %v906 = vmul.f32 %v903, %v905
    %v907 = vmul.f32 %v904, %v905
    %v908 = vperm.slane %v141, 6
    %v909 = vadd.f32 %v906, %v908
    %v910 = vadd.f32 %v907, %v908
    %v911 = vpack.c.bf16 %v910, %v909
    %v912 = vld [vmem:[#allocation7] sm:$0xf]
    %v913 = vld [vmem:[#allocation7 + $0x4] sm:$0xf]
    %v914 = vld [vmem:[#allocation7 + $0x8] sm:$0xf]
    %v915 = vld [vmem:[#allocation7 + $0xc] sm:$0xf]
    %v916 = vld [vmem:[%s8] sm:$0x1]
    %v918 = vperm.slane %v916, 0
    %v924 = vunpack.c.l.b16 %v912
    %v925 = vunpack.c.l.b16 %v913
    %v926 = vunpack.c.l.b16 %v914
    %v927 = vunpack.c.l.b16 %v915
    %v928 = vpack.c.b16 %v925, %v924
    %v929 = vpack.c.b16 %v927, %v926
    %v933 = vsel %vm161, %v911, 0
    %935 = vmatpush.bf16.msra.mxu0 0
    %936 = vmatpush.bf16.msra.mxu0 0
    %937 = vmatpush.bf16.msra.mxu0 0
    %938 = vmatpush.bf16.msra.mxu0 0
    %939 = vmatpush.bf16.msra.mxu0 0
    %940 = vmatpush.bf16.msra.mxu0 0
    %941 = vmatpush.bf16.msra.mxu0 %v929
    %942 = vmatpush.bf16.msra.mxu0 %v928
    %943 = vmatmul.bf16.gmra.mxu0 %v933
    %v944 = vpop.f32.mrf.mxu0
    %v945 = vadd.f32 %v918, %v944
    %v946 = vpop.f32.mrf.mxu0
    %v947 = vadd.f32 %v918, %v946
    %948 = vdwg.mxu0
    %v949 = vmax.f32 %v945, 0.0
    %v950 = vmax.f32 %v947, 0.0
    %v951 = vpack.c.bf16 %v950, %v949
    %v952 = vld [vmem:[%s6] sm:$0xf]
    %v953 = vld [vmem:[%s6 + $0x4] sm:$0xf]
    %v954 = vld [vmem:[%s6 + $0x8] sm:$0xf]
    %v955 = vld [vmem:[%s6 + $0xc] sm:$0xf]
    %v956 = vld [vmem:[%s6 + $0x10] sm:$0xf]
    %v957 = vld [vmem:[%s6 + $0x14] sm:$0xf]
    %v958 = vld [vmem:[%s6 + $0x18] sm:$0xf]
    %v959 = vld [vmem:[%s6 + $0x1c] sm:$0xf]
    %v960 = vperm.slane %v141, 4
    %v969 = vunpack.c.l.b16 %v952
    %v970 = vunpack.c.l.b16 %v953
    %v971 = vunpack.c.l.b16 %v954
    %v972 = vunpack.c.l.b16 %v955
    %v973 = vunpack.c.l.b16 %v956
    %v974 = vunpack.c.l.b16 %v957
    %v975 = vunpack.c.l.b16 %v958
    %v976 = vunpack.c.l.b16 %v959
    %v977 = vpack.c.b16 %v970, %v969
    %v978 = vpack.c.b16 %v972, %v971
    %v979 = vpack.c.b16 %v974, %v973
    %v980 = vpack.c.b16 %v976, %v975
    %vm985 = vcmask 523264
    %v987 = vsel %vm985, %v951, 0
    %989 = vmatpush.bf16.msra.mxu0 0
    %990 = vmatpush.bf16.msra.mxu0 0
    %991 = vmatpush.bf16.msra.mxu0 0
    %992 = vmatpush.bf16.msra.mxu0 0
    %993 = vmatpush.bf16.msra.mxu0 %v980
    %994 = vmatpush.bf16.msra.mxu0 %v979
    %995 = vmatpush.bf16.msra.mxu0 %v978
    %996 = vmatpush.bf16.msra.mxu0 %v977
    %997 = vmatmul.bf16.gmra.mxu0 %v987
    %v998 = vpop.f32.mrf.mxu0
    %v999 = vadd.f32 %v960, %v998
    %v1000 = vpop.f32.mrf.mxu0
    %v1001 = vadd.f32 %v960, %v1000
    %1002 = vdwg.mxu0
    %v1003 = vadd.f32 %v909, %v999
    %v1004 = vadd.f32 %v910, %v1001
    %v1005 = vsel %vm161, %v1003, 0.0
    %1006 = vadd.xlane.f32.xlu0 %v1005
    %v1007 = vpop.xlane.xlu0 %1006
    %v1008 = vsel %vm161, %v1004, 0.0
    %1009 = vadd.xlane.f32.xlu0 %v1008
    %v1010 = vpop.xlane.xlu0 %1009
    %v1011 = vmul.f32 %v1007, %v866
    %v1012 = vmul.f32 %v1010, %v866
    %v1013 = vsub.f32 %v1003, %v1011
    %v1014 = vsub.f32 %v1004, %v1012
    %v1015 = vmul.f32 %v1013, %v1013
    %v1016 = vmul.f32 %v1014, %v1014
    %v1017 = vsel %vm161, %v1015, 0.0
    %1018 = vadd.xlane.f32.xlu0 %v1017
    %v1019 = vpop.xlane.xlu0 %1018
    %v1020 = vsel %vm161, %v1016, 0.0
    %1021 = vadd.xlane.f32.xlu0 %v1020
    %v1022 = vpop.xlane.xlu0 %1021
    %v1023 = vmul.f32 %v1019, %v866
    %v1024 = vmul.f32 %v1022, %v866
    %v1025 = vadd.f32 %v1023, 1e-05
    %v1026 = vadd.f32 %v1024, 1e-05
    %v1027 = vrsqrt.pop %v1025
    %v1028 = vmul.f32 %v1027, %v1025
    %v1029 = vmul.f32 %v1028, %v1027
    %v1030 = vmul.f32 0.5, %v1029
    %v1031 = vsub.f32 1.5, %v1030
    %v1032 = vmul.f32 %v1027, %v1031
    %vm1033 = vweird.f32 %v1025
    %vm1034 = vweird.f32 %v1027
    %vm1035 = vmor %vm1033, %vm1034
    %v1036 = vsel %vm1035, %v1027, %v1032
    %v1037 = vrsqrt.pop %v1026
    %v1038 = vmul.f32 %v1037, %v1026
    %v1039 = vmul.f32 %v1038, %v1037
    %v1040 = vmul.f32 0.5, %v1039
    %v1041 = vsub.f32 1.5, %v1040
    %v1042 = vmul.f32 %v1037, %v1041
    %vm1043 = vweird.f32 %v1026
    %vm1044 = vweird.f32 %v1037
    %vm1045 = vmor %vm1043, %vm1044
    %v1046 = vsel %vm1045, %v1037, %v1042
    %v1047 = vmul.f32 %v1013, %v1036
    %v1048 = vmul.f32 %v1014, %v1046
    %v1049 = vperm.slane %v141, 7
    %v1050 = vmul.f32 %v1047, %v1049
    %v1051 = vmul.f32 %v1048, %v1049
    %v1052 = vperm.slane %v142, 0
    %v1053 = vadd.f32 %v1050, %v1052
    %v1054 = vadd.f32 %v1051, %v1052
    %s1055 = scalar_lea.vmem %s7, 16
    %v1056 = vld [vmem:[%s1055] sm:$0xff]
    %v1057 = vld [vmem:[%s1055 + $0x8] sm:$0x1]
    %v1058 = vpack.c.bf16 %v1054, %v1053
    %s1059 = scalar_lea.vmem %s3, 48
    %v1060 = vld [vmem:[%s1059] sm:$0xf]
    %v1061 = vld [vmem:[%s1059 + $0x4] sm:$0xf]
    %v1062 = vld [vmem:[%s1059 + $0x8] sm:$0xf]
    %v1063 = vld [vmem:[%s1059 + $0xc] sm:$0xf]
    %v1064 = vperm.slane %v1056, 0
    %v1069 = vunpack.c.l.b16 %v1060
    %v1070 = vunpack.c.l.b16 %v1061
    %v1071 = vunpack.c.l.b16 %v1062
    %v1072 = vunpack.c.l.b16 %v1063
    %v1073 = vpack.c.b16 %v1070, %v1069
    %v1074 = vpack.c.b16 %v1072, %v1071
    %v1078 = vsel %vm161, %v1058, 0
    %1080 = vmatpush.bf16.msra.mxu0 0
    %1081 = vmatpush.bf16.msra.mxu0 0
    %1082 = vmatpush.bf16.msra.mxu0 0
    %1083 = vmatpush.bf16.msra.mxu0 0
    %1084 = vmatpush.bf16.msra.mxu0 0
    %1085 = vmatpush.bf16.msra.mxu0 0
    %1086 = vmatpush.bf16.msra.mxu0 %v1074
    %1087 = vmatpush.bf16.msra.mxu0 %v1073
    %1088 = vmatmul.bf16.gmra.mxu0 %v1078
    %v1089 = vpop.f32.mrf.mxu0
    %v1090 = vadd.f32 %v1064, %v1089
    %v1091 = vpop.f32.mrf.mxu0
    %v1092 = vadd.f32 %v1064, %v1091
    %1093 = vdwg.mxu0
    %s1094 = scalar_lea.vmem %s3, 64
    %v1095 = vld [vmem:[%s1094] sm:$0xf]
    %v1096 = vld [vmem:[%s1094 + $0x4] sm:$0xf]
    %v1097 = vld [vmem:[%s1094 + $0x8] sm:$0xf]
    %v1098 = vld [vmem:[%s1094 + $0xc] sm:$0xf]
    %v1099 = vperm.slane %v1056, 1
    %v1104 = vunpack.c.l.b16 %v1095
    %v1105 = vunpack.c.l.b16 %v1096
    %v1106 = vunpack.c.l.b16 %v1097
    %v1107 = vunpack.c.l.b16 %v1098
    %v1108 = vpack.c.b16 %v1105, %v1104
    %v1109 = vpack.c.b16 %v1107, %v1106
    %1112 = vmatpush.bf16.msra.mxu0 0
    %1113 = vmatpush.bf16.msra.mxu0 0
    %1114 = vmatpush.bf16.msra.mxu0 0
    %1115 = vmatpush.bf16.msra.mxu0 0
    %1116 = vmatpush.bf16.msra.mxu0 0
    %1117 = vmatpush.bf16.msra.mxu0 0
    %1118 = vmatpush.bf16.msra.mxu0 %v1109
    %1119 = vmatpush.bf16.msra.mxu0 %v1108
    %1120 = vmatmul.bf16.gmra.mxu0 %v1078
    %v1121 = vpop.f32.mrf.mxu0
    %v1122 = vadd.f32 %v1099, %v1121
    %v1123 = vpop.f32.mrf.mxu0
    %v1124 = vadd.f32 %v1099, %v1123
    %1125 = vdwg.mxu0
    %s1126 = scalar_lea.vmem %s3, 80
    %v1127 = vld [vmem:[%s1126] sm:$0xf]
    %v1128 = vld [vmem:[%s1126 + $0x4] sm:$0xf]
    %v1129 = vld [vmem:[%s1126 + $0x8] sm:$0xf]
    %v1130 = vld [vmem:[%s1126 + $0xc] sm:$0xf]
    %v1131 = vperm.slane %v1056, 2
    %v1136 = vunpack.c.l.b16 %v1127
    %v1137 = vunpack.c.l.b16 %v1128
    %v1138 = vunpack.c.l.b16 %v1129
    %v1139 = vunpack.c.l.b16 %v1130
    %v1140 = vpack.c.b16 %v1137, %v1136
    %v1141 = vpack.c.b16 %v1139, %v1138
    %1144 = vmatpush.bf16.msra.mxu0 0
    %1145 = vmatpush.bf16.msra.mxu0 0
    %1146 = vmatpush.bf16.msra.mxu0 0
    %1147 = vmatpush.bf16.msra.mxu0 0
    %1148 = vmatpush.bf16.msra.mxu0 0
    %1149 = vmatpush.bf16.msra.mxu0 0
    %1150 = vmatpush.bf16.msra.mxu0 %v1141
    %1151 = vmatpush.bf16.msra.mxu0 %v1140
    %1152 = vmatmul.bf16.gmra.mxu0 %v1078
    %v1153 = vpop.f32.mrf.mxu0
    %v1154 = vadd.f32 %v1131, %v1153
    %v1155 = vpop.f32.mrf.mxu0
    %v1156 = vadd.f32 %v1131, %v1155
    %1157 = vdwg.mxu0
    %v1158 = vmul.f32 %v1090, 0.35355338
    %v1159 = vmul.f32 %v1092, 0.35355338
    %1162 = vrot.lane.b32.xlu0 %v1158, 120
    %v1163 = vpop.permute.xlu0 %1162
    %1164 = vrot.lane.b32.xlu0 %v1159, 120
    %v1165 = vpop.permute.xlu0 %1164
    %1168 = vrot.lane.b32.xlu0 %v1158, 112
    %v1169 = vpop.permute.xlu0 %1168
    %1170 = vrot.lane.b32.xlu0 %v1159, 112
    %v1171 = vpop.permute.xlu0 %1170
    %1174 = vrot.lane.b32.xlu0 %v1158, 104
    %v1175 = vpop.permute.xlu0 %1174
    %1176 = vrot.lane.b32.xlu0 %v1159, 104
    %v1177 = vpop.permute.xlu0 %1176
    %v1180 = vpack.c.bf16 %v1158, %v1158
    %v1181 = vpack.c.bf16 %v1159, %v1159
    %v1182 = vpack.c.bf16 %v1163, %v1163
    %v1183 = vpack.c.bf16 %v1165, %v1165
    %v1184 = vpack.c.bf16 %v1169, %v1169
    %v1185 = vpack.c.bf16 %v1171, %v1171
    %v1186 = vpack.c.bf16 %v1175, %v1175
    %v1187 = vpack.c.bf16 %v1177, %v1177
    %1190 = vrot.lane.b32.xlu0 %v1122, 120
    %v1191 = vpop.permute.xlu0 %1190
    %1192 = vrot.lane.b32.xlu0 %v1124, 120
    %v1193 = vpop.permute.xlu0 %1192
    %1196 = vrot.lane.b32.xlu0 %v1122, 112
    %v1197 = vpop.permute.xlu0 %1196
    %1198 = vrot.lane.b32.xlu0 %v1124, 112
    %v1199 = vpop.permute.xlu0 %1198
    %1202 = vrot.lane.b32.xlu0 %v1122, 104
    %v1203 = vpop.permute.xlu0 %1202
    %1204 = vrot.lane.b32.xlu0 %v1124, 104
    %v1205 = vpop.permute.xlu0 %1204
    %v1208 = vpack.c.bf16 %v1122, %v1122
    %v1209 = vpack.c.bf16 %v1124, %v1124
    %v1210 = vpack.c.bf16 %v1191, %v1191
    %v1211 = vpack.c.bf16 %v1193, %v1193
    %v1212 = vpack.c.bf16 %v1197, %v1197
    %v1213 = vpack.c.bf16 %v1199, %v1199
    %v1214 = vpack.c.bf16 %v1203, %v1203
    %v1215 = vpack.c.bf16 %v1205, %v1205
    %1218 = vrot.lane.b32.xlu0 %v1154, 120
    %v1219 = vpop.permute.xlu0 %1218
    %1220 = vrot.lane.b32.xlu0 %v1156, 120
    %v1221 = vpop.permute.xlu0 %1220
    %1224 = vrot.lane.b32.xlu0 %v1154, 112
    %v1225 = vpop.permute.xlu0 %1224
    %1226 = vrot.lane.b32.xlu0 %v1156, 112
    %v1227 = vpop.permute.xlu0 %1226
    %1230 = vrot.lane.b32.xlu0 %v1154, 104
    %v1231 = vpop.permute.xlu0 %1230
    %1232 = vrot.lane.b32.xlu0 %v1156, 104
    %v1233 = vpop.permute.xlu0 %1232
    %v1236 = vpack.c.bf16 %v1154, %v1154
    %v1237 = vpack.c.bf16 %v1156, %v1156
    %v1238 = vpack.c.bf16 %v1219, %v1219
    %v1239 = vpack.c.bf16 %v1221, %v1221
    %v1240 = vpack.c.bf16 %v1225, %v1225
    %v1241 = vpack.c.bf16 %v1227, %v1227
    %v1242 = vpack.c.bf16 %v1231, %v1231
    %v1243 = vpack.c.bf16 %v1233, %v1233
    %v1245 = vsel %vm329, %v1180, 0
    %v1248 = vsel %vm329, %v1208, 0
    %1250 = vmatpush.bf16.xpose.msra.mxu0 0
    %1251 = vmatpush.bf16.xpose.msra.mxu0 0
    %1252 = vmatpush.bf16.xpose.msra.mxu0 0
    %1253 = vmatpush.bf16.xpose.msra.mxu0 0
    %1254 = vmatpush.bf16.xpose.msra.mxu0 0
    %1255 = vmatpush.bf16.xpose.msra.mxu0 0
    %1256 = vmatpush.bf16.xpose.msra.mxu0 0
    %1257 = vmatpush.bf16.xpose.msra.mxu0 %v1248
    %1258 = vmatmul.bf16.gmra.mxu0 %v1245
    %v1259 = vpop.f32.mrf.mxu0
    %v1260 = vadd.f32 0.0, %v1259
    %v1261 = vpop.f32.mrf.mxu0
    %1262 = vdwg.mxu0
    %v1264 = vsel %vm329, %v1181, 0
    %v1267 = vsel %vm329, %v1209, 0
    %1269 = vmatpush.bf16.xpose.msra.mxu0 0
    %1270 = vmatpush.bf16.xpose.msra.mxu0 0
    %1271 = vmatpush.bf16.xpose.msra.mxu0 0
    %1272 = vmatpush.bf16.xpose.msra.mxu0 0
    %1273 = vmatpush.bf16.xpose.msra.mxu0 0
    %1274 = vmatpush.bf16.xpose.msra.mxu0 0
    %1275 = vmatpush.bf16.xpose.msra.mxu0 0
    %1276 = vmatpush.bf16.xpose.msra.mxu0 %v1267
    %1277 = vmatmul.bf16.gmra.mxu0 %v1264
    %v1278 = vpop.f32.mrf.mxu0
    %v1279 = vadd.f32 0.0, %v1278
    %v1280 = vpop.f32.mrf.mxu0
    %1281 = vdwg.mxu0
    %v1283 = vsel %vm329, %v1182, 0
    %v1286 = vsel %vm329, %v1210, 0
    %1288 = vmatpush.bf16.xpose.msra.mxu0 0
    %1289 = vmatpush.bf16.xpose.msra.mxu0 0
    %1290 = vmatpush.bf16.xpose.msra.mxu0 0
    %1291 = vmatpush.bf16.xpose.msra.mxu0 0
    %1292 = vmatpush.bf16.xpose.msra.mxu0 0
    %1293 = vmatpush.bf16.xpose.msra.mxu0 0
    %1294 = vmatpush.bf16.xpose.msra.mxu0 0
    %1295 = vmatpush.bf16.xpose.msra.mxu0 %v1286
    %1296 = vmatmul.bf16.gmra.mxu0 %v1283
    %v1297 = vpop.f32.mrf.mxu0
    %v1298 = vadd.f32 0.0, %v1297
    %v1299 = vpop.f32.mrf.mxu0
    %1300 = vdwg.mxu0
    %v1302 = vsel %vm329, %v1183, 0
    %v1305 = vsel %vm329, %v1211, 0
    %1307 = vmatpush.bf16.xpose.msra.mxu0 0
    %1308 = vmatpush.bf16.xpose.msra.mxu0 0
    %1309 = vmatpush.bf16.xpose.msra.mxu0 0
    %1310 = vmatpush.bf16.xpose.msra.mxu0 0
    %1311 = vmatpush.bf16.xpose.msra.mxu0 0
    %1312 = vmatpush.bf16.xpose.msra.mxu0 0
    %1313 = vmatpush.bf16.xpose.msra.mxu0 0
    %1314 = vmatpush.bf16.xpose.msra.mxu0 %v1305
    %1315 = vmatmul.bf16.gmra.mxu0 %v1302
    %v1316 = vpop.f32.mrf.mxu0
    %v1317 = vadd.f32 0.0, %v1316
    %v1318 = vpop.f32.mrf.mxu0
    %1319 = vdwg.mxu0
    %v1321 = vsel %vm329, %v1184, 0
    %v1324 = vsel %vm329, %v1212, 0
    %1326 = vmatpush.bf16.xpose.msra.mxu0 0
    %1327 = vmatpush.bf16.xpose.msra.mxu0 0
    %1328 = vmatpush.bf16.xpose.msra.mxu0 0
    %1329 = vmatpush.bf16.xpose.msra.mxu0 0
    %1330 = vmatpush.bf16.xpose.msra.mxu0 0
    %1331 = vmatpush.bf16.xpose.msra.mxu0 0
    %1332 = vmatpush.bf16.xpose.msra.mxu0 0
    %1333 = vmatpush.bf16.xpose.msra.mxu0 %v1324
    %1334 = vmatmul.bf16.gmra.mxu0 %v1321
    %v1335 = vpop.f32.mrf.mxu0
    %v1336 = vadd.f32 0.0, %v1335
    %v1337 = vpop.f32.mrf.mxu0
    %1338 = vdwg.mxu0
    %v1340 = vsel %vm329, %v1185, 0
    %v1343 = vsel %vm329, %v1213, 0
    %1345 = vmatpush.bf16.xpose.msra.mxu0 0
    %1346 = vmatpush.bf16.xpose.msra.mxu0 0
    %1347 = vmatpush.bf16.xpose.msra.mxu0 0
    %1348 = vmatpush.bf16.xpose.msra.mxu0 0
    %1349 = vmatpush.bf16.xpose.msra.mxu0 0
    %1350 = vmatpush.bf16.xpose.msra.mxu0 0
    %1351 = vmatpush.bf16.xpose.msra.mxu0 0
    %1352 = vmatpush.bf16.xpose.msra.mxu0 %v1343
    %1353 = vmatmul.bf16.gmra.mxu0 %v1340
    %v1354 = vpop.f32.mrf.mxu0
    %v1355 = vadd.f32 0.0, %v1354
    %v1356 = vpop.f32.mrf.mxu0
    %1357 = vdwg.mxu0
    %v1359 = vsel %vm329, %v1186, 0
    %v1362 = vsel %vm329, %v1214, 0
    %1364 = vmatpush.bf16.xpose.msra.mxu0 0
    %1365 = vmatpush.bf16.xpose.msra.mxu0 0
    %1366 = vmatpush.bf16.xpose.msra.mxu0 0
    %1367 = vmatpush.bf16.xpose.msra.mxu0 0
    %1368 = vmatpush.bf16.xpose.msra.mxu0 0
    %1369 = vmatpush.bf16.xpose.msra.mxu0 0
    %1370 = vmatpush.bf16.xpose.msra.mxu0 0
    %1371 = vmatpush.bf16.xpose.msra.mxu0 %v1362
    %1372 = vmatmul.bf16.gmra.mxu0 %v1359
    %v1373 = vpop.f32.mrf.mxu0
    %v1374 = vadd.f32 0.0, %v1373
    %v1375 = vpop.f32.mrf.mxu0
    %1376 = vdwg.mxu0
    %v1378 = vsel %vm329, %v1187, 0
    %v1381 = vsel %vm329, %v1215, 0
    %1383 = vmatpush.bf16.xpose.msra.mxu0 0
    %1384 = vmatpush.bf16.xpose.msra.mxu0 0
    %1385 = vmatpush.bf16.xpose.msra.mxu0 0
    %1386 = vmatpush.bf16.xpose.msra.mxu0 0
    %1387 = vmatpush.bf16.xpose.msra.mxu0 0
    %1388 = vmatpush.bf16.xpose.msra.mxu0 0
    %1389 = vmatpush.bf16.xpose.msra.mxu0 0
    %1390 = vmatpush.bf16.xpose.msra.mxu0 %v1381
    %1391 = vmatmul.bf16.gmra.mxu0 %v1378
    %v1392 = vpop.f32.mrf.mxu0
    %v1393 = vadd.f32 0.0, %v1392
    %v1394 = vpop.f32.mrf.mxu0
    %1395 = vdwg.mxu0
    %v1396 = vsel %vm329, %v1260, -inf
    %1397 = vmax.xlane.f32.xlu0 %v1396
    %v1398 = vpop.xlane.xlu0 %1397
    %v1399 = vsel %vm329, %v1279, -inf
    %1400 = vmax.xlane.f32.xlu0 %v1399
    %v1401 = vpop.xlane.xlu0 %1400
    %v1402 = vsel %vm329, %v1298, -inf
    %1403 = vmax.xlane.f32.xlu0 %v1402
    %v1404 = vpop.xlane.xlu0 %1403
    %v1405 = vsel %vm329, %v1317, -inf
    %1406 = vmax.xlane.f32.xlu0 %v1405
    %v1407 = vpop.xlane.xlu0 %1406
    %v1408 = vsel %vm329, %v1336, -inf
    %1409 = vmax.xlane.f32.xlu0 %v1408
    %v1410 = vpop.xlane.xlu0 %1409
    %v1411 = vsel %vm329, %v1355, -inf
    %1412 = vmax.xlane.f32.xlu0 %v1411
    %v1413 = vpop.xlane.xlu0 %1412
    %v1414 = vsel %vm329, %v1374, -inf
    %1415 = vmax.xlane.f32.xlu0 %v1414
    %v1416 = vpop.xlane.xlu0 %1415
    %v1417 = vsel %vm329, %v1393, -inf
    %1418 = vmax.xlane.f32.xlu0 %v1417
    %v1419 = vpop.xlane.xlu0 %1418
    %v1420 = vsub.f32 %v1260, %v1398
    %v1421 = vsub.f32 %v1279, %v1401
    %v1422 = vsub.f32 %v1298, %v1404
    %v1423 = vsub.f32 %v1317, %v1407
    %v1424 = vsub.f32 %v1336, %v1410
    %v1425 = vsub.f32 %v1355, %v1413
    %v1426 = vsub.f32 %v1374, %v1416
    %v1427 = vsub.f32 %v1393, %v1419
    %v1428 = vmul.f32 %v1420, 1.442695
    %v1429 = vpow.pop %v1428
    %v1430 = vmul.f32 %v1421, 1.442695
    %v1431 = vpow.pop %v1430
    %v1432 = vmul.f32 %v1422, 1.442695
    %v1433 = vpow.pop %v1432
    %v1434 = vmul.f32 %v1423, 1.442695
    %v1435 = vpow.pop %v1434
    %v1436 = vmul.f32 %v1424, 1.442695
    %v1437 = vpow.pop %v1436
    %v1438 = vmul.f32 %v1425, 1.442695
    %v1439 = vpow.pop %v1438
    %v1440 = vmul.f32 %v1426, 1.442695
    %v1441 = vpow.pop %v1440
    %v1442 = vmul.f32 %v1427, 1.442695
    %v1443 = vpow.pop %v1442
    %v1444 = vsel %vm329, %v1429, 0.0
    %1445 = vadd.xlane.f32.xlu0 %v1444
    %v1446 = vpop.xlane.xlu0 %1445
    %v1447 = vsel %vm329, %v1431, 0.0
    %1448 = vadd.xlane.f32.xlu0 %v1447
    %v1449 = vpop.xlane.xlu0 %1448
    %v1450 = vsel %vm329, %v1433, 0.0
    %1451 = vadd.xlane.f32.xlu0 %v1450
    %v1452 = vpop.xlane.xlu0 %1451
    %v1453 = vsel %vm329, %v1435, 0.0
    %1454 = vadd.xlane.f32.xlu0 %v1453
    %v1455 = vpop.xlane.xlu0 %1454
    %v1456 = vsel %vm329, %v1437, 0.0
    %1457 = vadd.xlane.f32.xlu0 %v1456
    %v1458 = vpop.xlane.xlu0 %1457
    %v1459 = vsel %vm329, %v1439, 0.0
    %1460 = vadd.xlane.f32.xlu0 %v1459
    %v1461 = vpop.xlane.xlu0 %1460
    %v1462 = vsel %vm329, %v1441, 0.0
    %1463 = vadd.xlane.f32.xlu0 %v1462
    %v1464 = vpop.xlane.xlu0 %1463
    %v1465 = vsel %vm329, %v1443, 0.0
    %1466 = vadd.xlane.f32.xlu0 %v1465
    %v1467 = vpop.xlane.xlu0 %1466
    %v1468 = vrcp.pop %v1446
    %v1469 = vrcp.pop %v1449
    %v1470 = vrcp.pop %v1452
    %v1471 = vrcp.pop %v1455
    %v1472 = vrcp.pop %v1458
    %v1473 = vrcp.pop %v1461
    %v1474 = vrcp.pop %v1464
    %v1475 = vrcp.pop %v1467
    %v1476 = vmul.f32 %v1429, %v1468
    %v1477 = vmul.f32 %v1431, %v1469
    %v1478 = vmul.f32 %v1433, %v1470
    %v1479 = vmul.f32 %v1435, %v1471
    %v1480 = vmul.f32 %v1437, %v1472
    %v1481 = vmul.f32 %v1439, %v1473
    %v1482 = vmul.f32 %v1441, %v1474
    %v1483 = vmul.f32 %v1443, %v1475
    %v1484 = vpack.c.bf16 %v1476, %v1476
    %v1485 = vpack.c.bf16 %v1477, %v1477
    %v1486 = vpack.c.bf16 %v1478, %v1478
    %v1487 = vpack.c.bf16 %v1479, %v1479
    %v1488 = vpack.c.bf16 %v1480, %v1480
    %v1489 = vpack.c.bf16 %v1481, %v1481
    %v1490 = vpack.c.bf16 %v1482, %v1482
    %v1491 = vpack.c.bf16 %v1483, %v1483
    %v1493 = vsel %vm329, %v1484, 0
    %v1496 = vsel %vm581, %v1236, 0
    %1498 = vmatpush.bf16.msra.mxu0 0
    %1499 = vmatpush.bf16.msra.mxu0 0
    %1500 = vmatpush.bf16.msra.mxu0 0
    %1501 = vmatpush.bf16.msra.mxu0 0
    %1502 = vmatpush.bf16.msra.mxu0 0
    %1503 = vmatpush.bf16.msra.mxu0 0
    %1504 = vmatpush.bf16.msra.mxu0 0
    %1505 = vmatpush.bf16.msra.mxu0 %v1496
    %1506 = vmatmul.bf16.gmra.mxu0 %v1493
    %v1507 = vpop.f32.mrf.mxu0
    %v1508 = vadd.f32 0.0, %v1507
    %v1509 = vpop.f32.mrf.mxu0
    %1510 = vdwg.mxu0
    %v1512 = vsel %vm329, %v1485, 0
    %v1515 = vsel %vm581, %v1237, 0
    %1517 = vmatpush.bf16.msra.mxu0 0
    %1518 = vmatpush.bf16.msra.mxu0 0
    %1519 = vmatpush.bf16.msra.mxu0 0
    %1520 = vmatpush.bf16.msra.mxu0 0
    %1521 = vmatpush.bf16.msra.mxu0 0
    %1522 = vmatpush.bf16.msra.mxu0 0
    %1523 = vmatpush.bf16.msra.mxu0 0
    %1524 = vmatpush.bf16.msra.mxu0 %v1515
    %1525 = vmatmul.bf16.gmra.mxu0 %v1512
    %v1526 = vpop.f32.mrf.mxu0
    %v1527 = vadd.f32 0.0, %v1526
    %v1528 = vpop.f32.mrf.mxu0
    %1529 = vdwg.mxu0
    %v1531 = vsel %vm329, %v1486, 0
    %v1534 = vsel %vm581, %v1238, 0
    %1536 = vmatpush.bf16.msra.mxu0 0
    %1537 = vmatpush.bf16.msra.mxu0 0
    %1538 = vmatpush.bf16.msra.mxu0 0
    %1539 = vmatpush.bf16.msra.mxu0 0
    %1540 = vmatpush.bf16.msra.mxu0 0
    %1541 = vmatpush.bf16.msra.mxu0 0
    %1542 = vmatpush.bf16.msra.mxu0 0
    %1543 = vmatpush.bf16.msra.mxu0 %v1534
    %1544 = vmatmul.bf16.gmra.mxu0 %v1531
    %v1545 = vpop.f32.mrf.mxu0
    %v1546 = vadd.f32 0.0, %v1545
    %v1547 = vpop.f32.mrf.mxu0
    %1548 = vdwg.mxu0
    %v1550 = vsel %vm329, %v1487, 0
    %v1553 = vsel %vm581, %v1239, 0
    %1555 = vmatpush.bf16.msra.mxu0 0
    %1556 = vmatpush.bf16.msra.mxu0 0
    %1557 = vmatpush.bf16.msra.mxu0 0
    %1558 = vmatpush.bf16.msra.mxu0 0
    %1559 = vmatpush.bf16.msra.mxu0 0
    %1560 = vmatpush.bf16.msra.mxu0 0
    %1561 = vmatpush.bf16.msra.mxu0 0
    %1562 = vmatpush.bf16.msra.mxu0 %v1553
    %1563 = vmatmul.bf16.gmra.mxu0 %v1550
    %v1564 = vpop.f32.mrf.mxu0
    %v1565 = vadd.f32 0.0, %v1564
    %v1566 = vpop.f32.mrf.mxu0
    %1567 = vdwg.mxu0
    %v1569 = vsel %vm329, %v1488, 0
    %v1572 = vsel %vm581, %v1240, 0
    %1574 = vmatpush.bf16.msra.mxu0 0
    %1575 = vmatpush.bf16.msra.mxu0 0
    %1576 = vmatpush.bf16.msra.mxu0 0
    %1577 = vmatpush.bf16.msra.mxu0 0
    %1578 = vmatpush.bf16.msra.mxu0 0
    %1579 = vmatpush.bf16.msra.mxu0 0
    %1580 = vmatpush.bf16.msra.mxu0 0
    %1581 = vmatpush.bf16.msra.mxu0 %v1572
    %1582 = vmatmul.bf16.gmra.mxu0 %v1569
    %v1583 = vpop.f32.mrf.mxu0
    %v1584 = vadd.f32 0.0, %v1583
    %v1585 = vpop.f32.mrf.mxu0
    %1586 = vdwg.mxu0
    %v1588 = vsel %vm329, %v1489, 0
    %v1591 = vsel %vm581, %v1241, 0
    %1593 = vmatpush.bf16.msra.mxu0 0
    %1594 = vmatpush.bf16.msra.mxu0 0
    %1595 = vmatpush.bf16.msra.mxu0 0
    %1596 = vmatpush.bf16.msra.mxu0 0
    %1597 = vmatpush.bf16.msra.mxu0 0
    %1598 = vmatpush.bf16.msra.mxu0 0
    %1599 = vmatpush.bf16.msra.mxu0 0
    %1600 = vmatpush.bf16.msra.mxu0 %v1591
    %1601 = vmatmul.bf16.gmra.mxu0 %v1588
    %v1602 = vpop.f32.mrf.mxu0
    %v1603 = vadd.f32 0.0, %v1602
    %v1604 = vpop.f32.mrf.mxu0
    %1605 = vdwg.mxu0
    %v1607 = vsel %vm329, %v1490, 0
    %v1610 = vsel %vm581, %v1242, 0
    %1612 = vmatpush.bf16.msra.mxu0 0
    %1613 = vmatpush.bf16.msra.mxu0 0
    %1614 = vmatpush.bf16.msra.mxu0 0
    %1615 = vmatpush.bf16.msra.mxu0 0
    %1616 = vmatpush.bf16.msra.mxu0 0
    %1617 = vmatpush.bf16.msra.mxu0 0
    %1618 = vmatpush.bf16.msra.mxu0 0
    %1619 = vmatpush.bf16.msra.mxu0 %v1610
    %1620 = vmatmul.bf16.gmra.mxu0 %v1607
    %v1621 = vpop.f32.mrf.mxu0
    %v1622 = vadd.f32 0.0, %v1621
    %v1623 = vpop.f32.mrf.mxu0
    %1624 = vdwg.mxu0
    %v1626 = vsel %vm329, %v1491, 0
    %v1629 = vsel %vm581, %v1243, 0
    %1631 = vmatpush.bf16.msra.mxu0 0
    %1632 = vmatpush.bf16.msra.mxu0 0
    %1633 = vmatpush.bf16.msra.mxu0 0
    %1634 = vmatpush.bf16.msra.mxu0 0
    %1635 = vmatpush.bf16.msra.mxu0 0
    %1636 = vmatpush.bf16.msra.mxu0 0
    %1637 = vmatpush.bf16.msra.mxu0 0
    %1638 = vmatpush.bf16.msra.mxu0 %v1629
    %1639 = vmatmul.bf16.gmra.mxu0 %v1626
    %v1640 = vpop.f32.mrf.mxu0
    %v1641 = vadd.f32 0.0, %v1640
    %v1642 = vpop.f32.mrf.mxu0
    %1643 = vdwg.mxu0
    %v1644 = vpack.c.bf16 %v1508, %v1508
    %v1645 = vpack.c.bf16 %v1527, %v1527
    %v1646 = vpack.c.bf16 %v1546, %v1546
    %v1647 = vpack.c.bf16 %v1565, %v1565
    %v1648 = vpack.c.bf16 %v1584, %v1584
    %v1649 = vpack.c.bf16 %v1603, %v1603
    %v1650 = vpack.c.bf16 %v1622, %v1622
    %v1651 = vpack.c.bf16 %v1641, %v1641
    %s1652 = scalar_lea.vmem [#allocation5], 16
    %v1653 = vld [vmem:[%s1652] sm:$0xf]
    %v1654 = vld [vmem:[%s1652 + $0x4] sm:$0xf]
    %v1655 = vld [vmem:[%s1652 + $0x8] sm:$0xf]
    %v1656 = vld [vmem:[%s1652 + $0xc] sm:$0xf]
    %v1659 = vunpack.c.l.b16 %v1644
    %v1660 = vunpack.c.l.b16 %v1645
    %v1661 = vpack.c.b16 %v1660, %v1659
    %v1663 = vsel %vm329, %v1661, 0
    %v1666 = vsel %vm581, %v1653, 0
    %1668 = vmatpush.bf16.msra.mxu0 0
    %1669 = vmatpush.bf16.msra.mxu0 0
    %1670 = vmatpush.bf16.msra.mxu0 0
    %1671 = vmatpush.bf16.msra.mxu0 0
    %1672 = vmatpush.bf16.msra.mxu0 0
    %1673 = vmatpush.bf16.msra.mxu0 0
    %1674 = vmatpush.bf16.msra.mxu0 0
    %1675 = vmatpush.bf16.msra.mxu0 %v1666
    %1676 = vmatmul.bf16.gmra.mxu0 %v1663
    %v1677 = vpop.f32.mrf.mxu0
    %v1678 = vadd.f32 0.0, %v1677
    %v1679 = vpop.f32.mrf.mxu0
    %v1680 = vadd.f32 0.0, %v1679
    %1681 = vdwg.mxu0
    %v1684 = vunpack.c.l.b16 %v1646
    %v1685 = vunpack.c.l.b16 %v1647
    %v1686 = vpack.c.b16 %v1685, %v1684
    %v1688 = vsel %vm329, %v1686, 0
    %v1691 = vsel %vm581, %v1654, 0
    %1693 = vmatpush.bf16.msra.mxu0 0
    %1694 = vmatpush.bf16.msra.mxu0 0
    %1695 = vmatpush.bf16.msra.mxu0 0
    %1696 = vmatpush.bf16.msra.mxu0 0
    %1697 = vmatpush.bf16.msra.mxu0 0
    %1698 = vmatpush.bf16.msra.mxu0 0
    %1699 = vmatpush.bf16.msra.mxu0 0
    %1700 = vmatpush.bf16.msra.mxu0 %v1691
    %1701 = vmatmul.bf16.gmra.mxu0 %v1688
    %v1702 = vpop.f32.mrf.mxu0
    %v1703 = vadd.f32 0.0, %v1702
    %v1704 = vpop.f32.mrf.mxu0
    %v1705 = vadd.f32 0.0, %v1704
    %1706 = vdwg.mxu0
    %v1709 = vunpack.c.l.b16 %v1648
    %v1710 = vunpack.c.l.b16 %v1649
    %v1711 = vpack.c.b16 %v1710, %v1709
    %v1713 = vsel %vm329, %v1711, 0
    %v1716 = vsel %vm581, %v1655, 0
    %1718 = vmatpush.bf16.msra.mxu0 0
    %1719 = vmatpush.bf16.msra.mxu0 0
    %1720 = vmatpush.bf16.msra.mxu0 0
    %1721 = vmatpush.bf16.msra.mxu0 0
    %1722 = vmatpush.bf16.msra.mxu0 0
    %1723 = vmatpush.bf16.msra.mxu0 0
    %1724 = vmatpush.bf16.msra.mxu0 0
    %1725 = vmatpush.bf16.msra.mxu0 %v1716
    %1726 = vmatmul.bf16.gmra.mxu0 %v1713
    %v1727 = vpop.f32.mrf.mxu0
    %v1728 = vadd.f32 0.0, %v1727
    %v1729 = vpop.f32.mrf.mxu0
    %v1730 = vadd.f32 0.0, %v1729
    %1731 = vdwg.mxu0
    %v1734 = vunpack.c.l.b16 %v1650
    %v1735 = vunpack.c.l.b16 %v1651
    %v1736 = vpack.c.b16 %v1735, %v1734
    %v1738 = vsel %vm329, %v1736, 0
    %v1741 = vsel %vm581, %v1656, 0
    %1743 = vmatpush.bf16.msra.mxu0 0
    %1744 = vmatpush.bf16.msra.mxu0 0
    %1745 = vmatpush.bf16.msra.mxu0 0
    %1746 = vmatpush.bf16.msra.mxu0 0
    %1747 = vmatpush.bf16.msra.mxu0 0
    %1748 = vmatpush.bf16.msra.mxu0 0
    %1749 = vmatpush.bf16.msra.mxu0 0
    %1750 = vmatpush.bf16.msra.mxu0 %v1741
    %1751 = vmatmul.bf16.gmra.mxu0 %v1738
    %v1752 = vpop.f32.mrf.mxu0
    %v1753 = vadd.f32 0.0, %v1752
    %v1754 = vpop.f32.mrf.mxu0
    %v1755 = vadd.f32 0.0, %v1754
    %1756 = vdwg.mxu0
    %v1757 = vadd.f32 %v1678, %v1703
    %v1758 = vadd.f32 %v1680, %v1705
    %v1759 = vadd.f32 %v1757, %v1728
    %v1760 = vadd.f32 %v1758, %v1730
    %v1761 = vadd.f32 %v1759, %v1753
    %v1762 = vadd.f32 %v1760, %v1755
    %v1763 = vperm.slane %v1056, 3
    %v1764 = vadd.f32 %v1761, %v1763
    %v1765 = vadd.f32 %v1762, %v1763
    %v1766 = vadd.f32 %v1053, %v1764
    %v1767 = vadd.f32 %v1054, %v1765
    %v1768 = vsel %vm161, %v1766, 0.0
    %1769 = vadd.xlane.f32.xlu0 %v1768
    %v1770 = vpop.xlane.xlu0 %1769
    %v1771 = vsel %vm161, %v1767, 0.0
    %1772 = vadd.xlane.f32.xlu0 %v1771
    %v1773 = vpop.xlane.xlu0 %1772
    %v1774 = vmul.f32 %v1770, %v866
    %v1775 = vmul.f32 %v1773, %v866
    %v1776 = vsub.f32 %v1766, %v1774
    %v1777 = vsub.f32 %v1767, %v1775
    %v1778 = vmul.f32 %v1776, %v1776
    %v1779 = vmul.f32 %v1777, %v1777
    %v1780 = vsel %vm161, %v1778, 0.0
    %1781 = vadd.xlane.f32.xlu0 %v1780
    %v1782 = vpop.xlane.xlu0 %1781
    %v1783 = vsel %vm161, %v1779, 0.0
    %1784 = vadd.xlane.f32.xlu0 %v1783
    %v1785 = vpop.xlane.xlu0 %1784
    %v1786 = vmul.f32 %v1782, %v866
    %v1787 = vmul.f32 %v1785, %v866
    %v1788 = vadd.f32 %v1786, 1e-05
    %v1789 = vadd.f32 %v1787, 1e-05
    %v1790 = vrsqrt.pop %v1788
    %v1791 = vmul.f32 %v1790, %v1788
    %v1792 = vmul.f32 %v1791, %v1790
    %v1793 = vmul.f32 0.5, %v1792
    %v1794 = vsub.f32 1.5, %v1793
    %v1795 = vmul.f32 %v1790, %v1794
    %vm1796 = vweird.f32 %v1788
    %vm1797 = vweird.f32 %v1790
    %vm1798 = vmor %vm1796, %vm1797
    %v1799 = vsel %vm1798, %v1790, %v1795
    %v1800 = vrsqrt.pop %v1789
    %v1801 = vmul.f32 %v1800, %v1789
    %v1802 = vmul.f32 %v1801, %v1800
    %v1803 = vmul.f32 0.5, %v1802
    %v1804 = vsub.f32 1.5, %v1803
    %v1805 = vmul.f32 %v1800, %v1804
    %vm1806 = vweird.f32 %v1789
    %vm1807 = vweird.f32 %v1800
    %vm1808 = vmor %vm1806, %vm1807
    %v1809 = vsel %vm1808, %v1800, %v1805
    %v1810 = vmul.f32 %v1776, %v1799
    %v1811 = vmul.f32 %v1777, %v1809
    %v1812 = vperm.slane %v1056, 5
    %v1813 = vmul.f32 %v1810, %v1812
    %v1814 = vmul.f32 %v1811, %v1812
    %v1815 = vperm.slane %v1056, 6
    %v1816 = vadd.f32 %v1813, %v1815
    %v1817 = vadd.f32 %v1814, %v1815
    %v1818 = vpack.c.bf16 %v1817, %v1816
    %s1819 = scalar_lea.vmem [#allocation7], 16
    %v1820 = vld [vmem:[%s1819] sm:$0xf]
    %v1821 = vld [vmem:[%s1819 + $0x4] sm:$0xf]
    %v1822 = vld [vmem:[%s1819 + $0x8] sm:$0xf]
    %v1823 = vld [vmem:[%s1819 + $0xc] sm:$0xf]
    %s1824 = scalar_lea.vmem %s8, 1
    %v1825 = vld [vmem:[%s1824] sm:$0x1]
    %v1827 = vperm.slane %v1825, 0
    %v1833 = vunpack.c.l.b16 %v1820
    %v1834 = vunpack.c.l.b16 %v1821
    %v1835 = vunpack.c.l.b16 %v1822
    %v1836 = vunpack.c.l.b16 %v1823
    %v1837 = vpack.c.b16 %v1834, %v1833
    %v1838 = vpack.c.b16 %v1836, %v1835
    %v1842 = vsel %vm161, %v1818, 0
    %1844 = vmatpush.bf16.msra.mxu0 0
    %1845 = vmatpush.bf16.msra.mxu0 0
    %1846 = vmatpush.bf16.msra.mxu0 0
    %1847 = vmatpush.bf16.msra.mxu0 0
    %1848 = vmatpush.bf16.msra.mxu0 0
    %1849 = vmatpush.bf16.msra.mxu0 0
    %1850 = vmatpush.bf16.msra.mxu0 %v1838
    %1851 = vmatpush.bf16.msra.mxu0 %v1837
    %1852 = vmatmul.bf16.gmra.mxu0 %v1842
    %v1853 = vpop.f32.mrf.mxu0
    %v1854 = vadd.f32 %v1827, %v1853
    %v1855 = vpop.f32.mrf.mxu0
    %v1856 = vadd.f32 %v1827, %v1855
    %1857 = vdwg.mxu0
    %v1858 = vmax.f32 %v1854, 0.0
    %v1859 = vmax.f32 %v1856, 0.0
    %v1860 = vpack.c.bf16 %v1859, %v1858
    %s1861 = scalar_lea.vmem %s6, 32
    %v1862 = vld [vmem:[%s1861] sm:$0xf]
    %v1863 = vld [vmem:[%s1861 + $0x4] sm:$0xf]
    %v1864 = vld [vmem:[%s1861 + $0x8] sm:$0xf]
    %v1865 = vld [vmem:[%s1861 + $0xc] sm:$0xf]
    %v1866 = vld [vmem:[%s1861 + $0x10] sm:$0xf]
    %v1867 = vld [vmem:[%s1861 + $0x14] sm:$0xf]
    %v1868 = vld [vmem:[%s1861 + $0x18] sm:$0xf]
    %v1869 = vld [vmem:[%s1861 + $0x1c] sm:$0xf]
    %v1870 = vperm.slane %v1056, 4
    %v1879 = vunpack.c.l.b16 %v1862
    %v1880 = vunpack.c.l.b16 %v1863
    %v1881 = vunpack.c.l.b16 %v1864
    %v1882 = vunpack.c.l.b16 %v1865
    %v1883 = vunpack.c.l.b16 %v1866
    %v1884 = vunpack.c.l.b16 %v1867
    %v1885 = vunpack.c.l.b16 %v1868
    %v1886 = vunpack.c.l.b16 %v1869
    %v1887 = vpack.c.b16 %v1880, %v1879
    %v1888 = vpack.c.b16 %v1882, %v1881
    %v1889 = vpack.c.b16 %v1884, %v1883
    %v1890 = vpack.c.b16 %v1886, %v1885
    %v1896 = vsel %vm985, %v1860, 0
    %1898 = vmatpush.bf16.msra.mxu0 0
    %1899 = vmatpush.bf16.msra.mxu0 0
    %1900 = vmatpush.bf16.msra.mxu0 0
    %1901 = vmatpush.bf16.msra.mxu0 0
    %1902 = vmatpush.bf16.msra.mxu0 %v1890
    %1903 = vmatpush.bf16.msra.mxu0 %v1889
    %1904 = vmatpush.bf16.msra.mxu0 %v1888
    %1905 = vmatpush.bf16.msra.mxu0 %v1887
    %1906 = vmatmul.bf16.gmra.mxu0 %v1896
    %v1907 = vpop.f32.mrf.mxu0
    %v1908 = vadd.f32 %v1870, %v1907
    %v1909 = vpop.f32.mrf.mxu0
    %v1910 = vadd.f32 %v1870, %v1909
    %1911 = vdwg.mxu0
    %v1912 = vadd.f32 %v1816, %v1908
    %v1913 = vadd.f32 %v1817, %v1910
    %v1914 = vsel %vm161, %v1912, 0.0
    %1915 = vadd.xlane.f32.xlu0 %v1914
    %v1916 = vpop.xlane.xlu0 %1915
    %v1917 = vsel %vm161, %v1913, 0.0
    %1918 = vadd.xlane.f32.xlu0 %v1917
    %v1919 = vpop.xlane.xlu0 %1918
    %v1920 = vmul.f32 %v1916, %v866
    %v1921 = vmul.f32 %v1919, %v866
    %v1922 = vsub.f32 %v1912, %v1920
    %v1923 = vsub.f32 %v1913, %v1921
    %v1924 = vmul.f32 %v1922, %v1922
    %v1925 = vmul.f32 %v1923, %v1923
    %v1926 = vsel %vm161, %v1924, 0.0
    %1927 = vadd.xlane.f32.xlu0 %v1926
    %v1928 = vpop.xlane.xlu0 %1927
    %v1929 = vsel %vm161, %v1925, 0.0
    %1930 = vadd.xlane.f32.xlu0 %v1929
    %v1931 = vpop.xlane.xlu0 %1930
    %v1932 = vmul.f32 %v1928, %v866
    %v1933 = vmul.f32 %v1931, %v866
    %v1934 = vadd.f32 %v1932, 1e-05
    %v1935 = vadd.f32 %v1933, 1e-05
    %v1936 = vrsqrt.pop %v1934
    %v1937 = vmul.f32 %v1936, %v1934
    %v1938 = vmul.f32 %v1937, %v1936
    %v1939 = vmul.f32 0.5, %v1938
    %v1940 = vsub.f32 1.5, %v1939
    %v1941 = vmul.f32 %v1936, %v1940
    %vm1942 = vweird.f32 %v1934
    %vm1943 = vweird.f32 %v1936
    %vm1944 = vmor %vm1942, %vm1943
    %v1945 = vsel %vm1944, %v1936, %v1941
    %v1946 = vrsqrt.pop %v1935
    %v1947 = vmul.f32 %v1946, %v1935
    %v1948 = vmul.f32 %v1947, %v1946
    %v1949 = vmul.f32 0.5, %v1948
    %v1950 = vsub.f32 1.5, %v1949
    %v1951 = vmul.f32 %v1946, %v1950
    %vm1952 = vweird.f32 %v1935
    %vm1953 = vweird.f32 %v1946
    %vm1954 = vmor %vm1952, %vm1953
    %v1955 = vsel %vm1954, %v1946, %v1951
    %v1956 = vmul.f32 %v1922, %v1945
    %v1957 = vmul.f32 %v1923, %v1955
    %v1958 = vperm.slane %v1056, 7
    %v1959 = vmul.f32 %v1956, %v1958
    %v1960 = vmul.f32 %v1957, %v1958
    %v1961 = vperm.slane %v1057, 0
    %v1962 = vadd.f32 %v1959, %v1961
    %v1963 = vadd.f32 %v1960, %v1961
    %v1964 = vpack.c.bf16 %v1963, %v1962
    %v1965 = vld [vmem:[#allocation8] sm:$0xf]
    %v1966 = vld [vmem:[#allocation8 + $0x4] sm:$0xf]
    %v1967 = vld [vmem:[#allocation8 + $0x8] sm:$0xf]
    %v1968 = vld [vmem:[#allocation8 + $0xc] sm:$0xf]
    %v1969 = vld [vmem:[%s10] sm:$0x1]
    %v1971 = vperm.slane %v1969, 0
    %v1977 = vunpack.c.l.b16 %v1965
    %v1978 = vunpack.c.l.b16 %v1966
    %v1979 = vunpack.c.l.b16 %v1967
    %v1980 = vunpack.c.l.b16 %v1968
    %v1981 = vpack.c.b16 %v1978, %v1977
    %v1982 = vpack.c.b16 %v1980, %v1979
    %v1986 = vsel %vm161, %v1964, 0
    %1988 = vmatpush.bf16.msra.mxu0 0
    %1989 = vmatpush.bf16.msra.mxu0 0
    %1990 = vmatpush.bf16.msra.mxu0 0
    %1991 = vmatpush.bf16.msra.mxu0 0
    %1992 = vmatpush.bf16.msra.mxu0 0
    %1993 = vmatpush.bf16.msra.mxu0 0
    %1994 = vmatpush.bf16.msra.mxu0 %v1982
    %1995 = vmatpush.bf16.msra.mxu0 %v1981
    %1996 = vmatmul.bf16.gmra.mxu0 %v1986
    %v1997 = vpop.f32.mrf.mxu0
    %v1998 = vadd.f32 %v1971, %v1997
    %v1999 = vpop.f32.mrf.mxu0
    %v2000 = vadd.f32 %v1971, %v1999
    %2001 = vdwg.mxu0
    %2002 = vst [vmem:[#allocation10] sm:$0xff] %v1998
    %2003 = vst [vmem:[#allocation10 + $0x8] sm:$0xff] %v2000
    // Predicated region
    $region62: #{tpu_custom_call.1} parent=1 // pred_check
      _
    $region63: #{tpu_custom_call.1} parent=1 // pred_check_branch
      %2005 = sbr.rel (0) target = $region65
    $region64: #{tpu_custom_call.1} parent=1 // pred_region
      %2007 = vsyncadd [#allocation4], 0
      %s2008 = sshll.u32 [#allocation10], 4
      %s2009 = int_to_ptr.vmem [resolvable:$true] %s2008
      %s2010 = sshll.u32 %s11, 4
      %s2011 = int_to_ptr.hbm [resolvable:$true] %s2010
      %2016 = dma.vmem_to_hbm [thread:$0]  %s2009, 256, %s2011, [#allocation4], 128, 128, 8
    $region65: #{tpu_custom_call.1} parent=1 // pred_fallthru
      _
    // Predicated region
    $region66: #{tpu_custom_call.1} parent=1 // pred_check
      _
    $region67: #{tpu_custom_call.1} parent=1 // pred_check_branch
      %2018 = sbr.rel (0) target = $region69
    $region68: #{tpu_custom_call.1} parent=1 // pred_region
      %2020 = dma.done [#allocation4], 256
    $region69: #{tpu_custom_call.1} parent=1 // pred_fallthru
      _
    %2021 = vsyncpa [#allocation3], 1
    %2022 = vsyncpa [#allocation6], 1
    %2023 = vsyncpa [#allocation9], 1
    %2024 = vsyncpa [#allocation4], 1

</llo_original>
